<compile_context>
chip_gen: v7x
topology: tpu7x:2x2x1
jax: 0.10.0
libtpu: 0.0.40
codegen_flags: <defaults>
</compile_context>

<pallas_src>
import functools

import jax
import jax.numpy as jnp
from jax.experimental import pallas as pl
from jax.experimental.pallas import tpu as pltpu

LANE = 128


# ----------------------------------------------------------------------------
# Fused kernel: one batch element per grid step.
#   embedding output -> all TemporalBlocks -> mean pool -> FC -> LogSoftmax
#   (or Sigmoid when num_classes == 1).
# ----------------------------------------------------------------------------
def _text_tcn_kernel(*refs, num_layers, K, dilations, has_ds, num_classes):
    # refs layout (all VMEM, one batch element per grid step):
    #   refs[0]      : x  (L, E_pad) bf16
    #   per layer i  : w1 (K, Cin_pad, H_pad) bf16, b1 (1, H_pad) f32,
    #                  w2 (K, H_pad,  H_pad) bf16, b2 (1, H_pad) f32,
    #                  [wd (Cin_pad, H_pad) bf16, bd (1, H_pad) f32] iff has_ds[i]
    #   then         : fc_w (H_pad, C_pad) bf16, fc_b (1, C_pad) f32
    #   refs[-1]     : out (1, C_pad) f32
    x_ref = refs[0]
    out_ref = refs[-1]
    L = x_ref.shape[0]

    def causal_conv(a_bf, w_ref, b_ref, dilation):
        # a_bf: (L, Cin_pad) bf16.  K per-tap matmuls accumulated in f32 —
        # no lane-axis concat, no reshapes.  Tap k reads x[t - (K-1-k)*d].
        a32 = a_bf.astype(jnp.float32)          # 32-bit operand for sublane roll
        acc = None
        for k in range(K):
            s = (K - 1 - k) * dilation
            if s >= L:                           # static: tap has no support
                continue
            if s == 0:
                tap = a_bf
            else:
                rolled = pltpu.roll(a32, shift=s, axis=0)      # XLU, not VALU
                t_idx = jax.lax.broadcasted_iota(jnp.int32, rolled.shape, 0)
                tap = jnp.where(t_idx >= s, rolled, 0.0).astype(jnp.bfloat16)
            y = jnp.dot(tap, w_ref[k], preferred_element_type=jnp.float32)
            acc = y if acc is None else acc + y
        if acc is None:
            acc = jnp.zeros((L, w_ref.shape[-1]), jnp.float32)
        return acc + b_ref[...]                  # bias added once, post-matmul

    # Running activation stays bf16 between layers; f32 only in local epilogues.
    x = x_ref[...]                               # (L, E_pad) bf16
    idx = 1
    for i in range(num_layers):
        w1, b1, w2, b2 = refs[idx], refs[idx + 1], refs[idx + 2], refs[idx + 3]
        idx += 4
        if has_ds[i]:
            wd, bd = refs[idx], refs[idx + 1]
            idx += 2
        d = dilations[i]

        h1 = jnp.maximum(causal_conv(x, w1, b1, d), 0.0).astype(jnp.bfloat16)
        h2 = jnp.maximum(causal_conv(h1, w2, b2, d), 0.0)      # f32
        if has_ds[i]:
            res = jnp.dot(x, wd[...], preferred_element_type=jnp.float32) + bd[...]
        else:
            res = x.astype(jnp.float32)
        x = jnp.maximum(h2 + res, 0.0).astype(jnp.bfloat16)
        # TODO(synk): dropout1/dropout2 are identity (eval mode).

    # ---- head: adaptive_avg_pool1d(., 1) -> Linear -> activation ----------
    fc_w, fc_b = refs[idx], refs[idx + 1]
    pooled = jnp.mean(x.astype(jnp.float32), axis=0, keepdims=True)   # (1, H_pad)
    logits = jnp.dot(pooled.astype(jnp.bfloat16), fc_w[...],
                     preferred_element_type=jnp.float32) + fc_b[...]  # (1, C_pad)
    if num_classes == 1:
        out_ref[...] = jax.nn.sigmoid(logits).astype(out_ref.dtype)
    else:
        # Mask the padded class lanes so they don't perturb the softmax.
        cls = jax.lax.broadcasted_iota(jnp.int32, logits.shape, 1)
        logits = jnp.where(cls < num_classes, logits, -1e30)
        m = jnp.max(logits, axis=1, keepdims=True)
        z = logits - m
        lse = jnp.log(jnp.sum(jnp.exp(z), axis=1, keepdims=True))
        out_ref[...] = (z - lse).astype(out_ref.dtype)


# ----------------------------------------------------------------------------
# Wrapper: pad to lane-native widths, build grid/BlockSpecs, one pallas_call.
# ----------------------------------------------------------------------------
def _round_up(n, m):
    return ((n + m - 1) // m) * m


def _pad_to(a, axis, target):
    pad = target - a.shape[axis]
    if pad == 0:
        return a
    widths = [(0, 0)] * a.ndim
    widths[axis] = (0, pad)
    return jnp.pad(a, widths)


def text_tcn_forward(token_ids, params, *, kernel_size, num_classes):
    """token_ids: (seq_len, batch) int32 (PyTorch input convention)."""
    emb = params["embedding"]
    _, E = emb.shape
    H = params["fc_w"].shape[0]
    e_pad = _round_up(E, LANE)
    h_pad = _round_up(H, LANE)
    c_pad = _round_up(num_classes, LANE)

    # TODO(synk): embedding gather stays in plain JAX (fused XLA gather); an
    # in-kernel scalar-prefetch row gather at these row sizes (E_pad*2 B/row)
    # would issue L tiny serial DMAs per batch step and not beat it — revisit
    # with a double-buffered in-kernel row gather for production seq lengths.
    emb_p = _pad_to(emb, 1, e_pad).astype(jnp.bfloat16)
    x = emb_p[token_ids.T]                       # (B, L, E_pad) bf16
    B, L, _ = x.shape

    inputs = [x]
    dilations, has_ds = [], []
    for i, (w1, b1, w2, b2, wd, bd) in enumerate(params["tcn"]):
        _, cin, _ = w1.shape
        cin_pad = _round_up(cin, LANE)
        inputs += [
            _pad_to(_pad_to(w1, 1, cin_pad), 2, h_pad).astype(jnp.bfloat16),
            _pad_to(b1, 1, h_pad),
            _pad_to(_pad_to(w2, 1, h_pad), 2, h_pad).astype(jnp.bfloat16),
            _pad_to(b2, 1, h_pad),
        ]
        if wd is not None:
            inputs += [
                _pad_to(_pad_to(wd, 0, cin_pad), 1, h_pad).astype(jnp.bfloat16),
                _pad_to(bd, 1, h_pad),
            ]
            has_ds.append(True)
        else:
            has_ds.append(False)
        dilations.append(2 ** i)
    inputs += [
        _pad_to(_pad_to(params["fc_w"], 0, h_pad), 1, c_pad).astype(jnp.bfloat16),
        _pad_to(params["fc_b"], 1, c_pad),
    ]

    kernel = functools.partial(
        _text_tcn_kernel,
        num_layers=len(params["tcn"]), K=kernel_size,
        dilations=tuple(dilations), has_ds=tuple(has_ds),
        num_classes=num_classes)

    def _const_spec(arr):
        zeros = (0,) * arr.ndim
        return pl.BlockSpec(arr.shape, lambda b, _z=zeros: _z)

    in_specs = [pl.BlockSpec((None, L, e_pad), lambda b: (b, 0, 0))]
    in_specs += [_const_spec(a) for a in inputs[1:]]
    out_specs = pl.BlockSpec((None, 1, c_pad), lambda b: (b, 0, 0))

    # VMEM budget: resident weights + double-buffered per-batch tiles + slack.
    const_bytes = sum(int(a.size) * a.dtype.itemsize for a in inputs[1:])
    tile_bytes = L * e_pad * 2 + c_pad * 4
    vmem_limit = int(min(max(const_bytes + 4 * tile_bytes + (4 << 20), 16 << 20),
                         64 << 20))

    out = pl.pallas_call(
        kernel,
        out_shape=jax.ShapeDtypeStruct((B, 1, c_pad), jnp.float32),
        grid=(B,),
        in_specs=in_specs,
        out_specs=out_specs,
        compiler_params=pltpu.CompilerParams(
            dimension_semantics=("parallel",),   # v7x: shard batch across 2 TCs
            vmem_limit_bytes=vmem_limit),
    )(*inputs)

    out = out.reshape(B, c_pad)[:, :num_classes]
    # PyTorch does .squeeze(); only squeeze the class axis (keeps batch rank
    # stable for B == 1).
    if num_classes == 1:
        out = jnp.squeeze(out, axis=-1)
    return out


# ----------------------------------------------------------------------------
# Pure-JAX f32 reference (mirrors the PyTorch module in eval mode).
# ----------------------------------------------------------------------------
def _reference_forward(token_ids, params, *, kernel_size, num_classes):
    K = kernel_size
    x = params["embedding"][token_ids.T]          # (B, L, E) f32
    B, L, _ = x.shape

    def conv(a, w, b, d):
        out = jnp.zeros(a.shape[:2] + (w.shape[-1],), jnp.float32)
        for k in range(K):
            s = (K - 1 - k) * d
            if s >= L:
                continue
            if s == 0:
                shifted = a
            else:
                shifted = jnp.concatenate(
                    [jnp.zeros((B, s, a.shape[-1]), a.dtype), a[:, :L - s, :]],
                    axis=1)
            out = out + jnp.einsum("blc,ch->blh", shifted, w[k])
        return out + b

    h = x
    for i, (w1, b1, w2, b2, wd, bd) in enumerate(params["tcn"]):
        d = 2 ** i
        h1 = jax.nn.relu(conv(h, w1, b1, d))
        h2 = jax.nn.relu(conv(h1, w2, b2, d))
        res = h if wd is None else jnp.einsum("blc,ch->blh", h, wd) + bd
        h = jax.nn.relu(h2 + res)
    pooled = h.mean(axis=1)                        # (B, H)
    logits = pooled @ params["fc_w"] + params["fc_b"]
    if num_classes == 1:
        return jax.nn.sigmoid(logits)[:, 0]
    return jax.nn.log_softmax(logits, axis=1)


def init_params(key, vocab_size, embedding_dim, hidden_dim, num_layers,
                kernel_size, num_classes):
    k_emb, k_tcn, k_fc = jax.random.split(key, 3)
    emb = 0.1 * jax.random.normal(k_emb, (vocab_size, embedding_dim), jnp.float32)
    emb = emb.at[1].set(0.0)  # padding_idx=1 row zero (PyTorch Embedding default)

    tcn = []
    layer_keys = jax.random.split(k_tcn, num_layers)
    for i in range(num_layers):
        cin = embedding_dim if i == 0 else hidden_dim
        k1, k2, k3, k4, k5, k6 = jax.random.split(layer_keys[i], 6)
        w1 = 0.05 * jax.random.normal(k1, (kernel_size, cin, hidden_dim), jnp.float32)
        b1 = 0.05 * jax.random.normal(k2, (1, hidden_dim), jnp.float32)
        w2 = 0.05 * jax.random.normal(k3, (kernel_size, hidden_dim, hidden_dim), jnp.float32)
        b2 = 0.05 * jax.random.normal(k4, (1, hidden_dim), jnp.float32)
        if cin != hidden_dim:
            wd = 0.05 * jax.random.normal(k5, (cin, hidden_dim), jnp.float32)
            bd = 0.05 * jax.random.normal(k6, (1, hidden_dim), jnp.float32)
        else:
            wd, bd = None, None
        tcn.append((w1, b1, w2, b2, wd, bd))

    kf1, kf2 = jax.random.split(k_fc)
    fc_w = 0.05 * jax.random.normal(kf1, (hidden_dim, num_classes), jnp.float32)
    fc_b = 0.05 * jax.random.normal(kf2, (1, num_classes), jnp.float32)
    return {"embedding": emb, "tcn": tcn, "fc_w": fc_w, "fc_b": fc_b}


if __name__ == "__main__":
    # Small shapes consistent with the module.
    vocab_size, embedding_dim, hidden_dim = 100, 16, 32
    num_layers, kernel_size, num_classes = 2, 2, 4
    seq_len, batch = 16, 2

    key = jax.random.PRNGKey(0)
    pkey, xkey = jax.random.split(key)
    params = init_params(pkey, vocab_size, embedding_dim, hidden_dim,
                         num_layers, kernel_size, num_classes)

    # token ids shaped (seq_len, batch), as the PyTorch forward expects.
    token_ids = jax.random.randint(xkey, (seq_len, batch), 0, vocab_size,
                                   dtype=jnp.int32)

    out = text_tcn_forward(token_ids, params,
                           kernel_size=kernel_size, num_classes=num_classes)
    jax.block_until_ready(out)
    assert out.shape == (batch, num_classes), out.shape

    # Relaxed-tolerance check vs. a pure-f32 reference (kernel matmuls are
    # bf16-in / f32-accumulate, so exact match is not expected).
    ref = _reference_forward(token_ids, params,
                             kernel_size=kernel_size, num_classes=num_classes)
    max_err = float(jnp.max(jnp.abs(out - ref)))
    assert max_err < 3e-2, f"max abs error vs reference: {max_err}"
    print("KERNEL_OK")
</pallas_src>

<mosaic_0001>
module attributes {stable_mosaic.version = 11 : i64} {
  func.func @_text_tcn_kernel(%arg0: i32, %arg1: memref<1x16x128xbf16, #tpu.memory_space<vmem>>, %arg2: memref<2x128x128xbf16, #tpu.memory_space<vmem>>, %arg3: memref<1x128xf32, #tpu.memory_space<vmem>>, %arg4: memref<2x128x128xbf16, #tpu.memory_space<vmem>>, %arg5: memref<1x128xf32, #tpu.memory_space<vmem>>, %arg6: memref<128x128xbf16, #tpu.memory_space<vmem>>, %arg7: memref<1x128xf32, #tpu.memory_space<vmem>>, %arg8: memref<2x128x128xbf16, #tpu.memory_space<vmem>>, %arg9: memref<1x128xf32, #tpu.memory_space<vmem>>, %arg10: memref<2x128x128xbf16, #tpu.memory_space<vmem>>, %arg11: memref<1x128xf32, #tpu.memory_space<vmem>>, %arg12: memref<128x128xbf16, #tpu.memory_space<vmem>>, %arg13: memref<1x128xf32, #tpu.memory_space<vmem>>, %arg14: memref<1x1x128xf32, #tpu.memory_space<vmem>>) attributes {dimension_semantics = [#tpu.dimension_semantics<parallel>], iteration_bounds = array<i64: 2>, scalar_prefetch = 0 : i64, scratch_operands = 0 : i64, tpu.core_type = #tpu.core_type<tc>, window_params = [{transform_indices = @transform_0, window_bounds = array<i64: 1, 16, 128>}, {pipeline_mode = #tpu.pipeline_mode<synchronous>, transform_indices = @transform_1, window_bounds = array<i64: 2, 128, 128>}, {pipeline_mode = #tpu.pipeline_mode<synchronous>, transform_indices = @transform_2, window_bounds = array<i64: 1, 128>}, {pipeline_mode = #tpu.pipeline_mode<synchronous>, transform_indices = @transform_3, window_bounds = array<i64: 2, 128, 128>}, {pipeline_mode = #tpu.pipeline_mode<synchronous>, transform_indices = @transform_4, window_bounds = array<i64: 1, 128>}, {pipeline_mode = #tpu.pipeline_mode<synchronous>, transform_indices = @transform_5, window_bounds = array<i64: 128, 128>}, {pipeline_mode = #tpu.pipeline_mode<synchronous>, transform_indices = @transform_6, window_bounds = array<i64: 1, 128>}, {pipeline_mode = #tpu.pipeline_mode<synchronous>, transform_indices = @transform_7, window_bounds = array<i64: 2, 128, 128>}, {pipeline_mode = #tpu.pipeline_mode<synchronous>, transform_indices = @transform_8, window_bounds = array<i64: 1, 128>}, {pipeline_mode = #tpu.pipeline_mode<synchronous>, transform_indices = @transform_9, window_bounds = array<i64: 2, 128, 128>}, {pipeline_mode = #tpu.pipeline_mode<synchronous>, transform_indices = @transform_10, window_bounds = array<i64: 1, 128>}, {pipeline_mode = #tpu.pipeline_mode<synchronous>, transform_indices = @transform_11, window_bounds = array<i64: 128, 128>}, {pipeline_mode = #tpu.pipeline_mode<synchronous>, transform_indices = @transform_12, window_bounds = array<i64: 1, 128>}, {transform_indices = @transform_13, window_bounds = array<i64: 1, 1, 128>}]} {
    %c0 = arith.constant 0 : index
    %c0_0 = arith.constant 0 : index
    %c0_1 = arith.constant 0 : index
    %0 = vector.load %arg1[%c0, %c0_0, %c0_1] : memref<1x16x128xbf16, #tpu.memory_space<vmem>>, vector<1x16x128xbf16>
    %1 = vector.shape_cast %0 : vector<1x16x128xbf16> to vector<16x128xbf16>
    %2 = arith.extf %1 : vector<16x128xbf16> to vector<16x128xf32>
    %c1_i32 = arith.constant 1 : i32
    %3 = tpu.dynamic_rotate %2 by %c1_i32 dim 0 : vector<16x128xf32>, i32 -> vector<16x128xf32>
    %4 = tpu.iota {dimensions = array<i32: 0>} : vector<16x128xi32>
    %c1_i32_2 = arith.constant 1 : i32
    %5 = vector.broadcast %c1_i32_2 : i32 to vector<16x128xi32>
    %6 = arith.cmpi sge, %4, %5 : vector<16x128xi32>
    %cst = arith.constant 0.000000e+00 : f32
    %7 = vector.broadcast %cst : f32 to vector<16x128xf32>
    %8 = arith.select %6, %3, %7 : vector<16x128xi1>, vector<16x128xf32>
    %9 = arith.truncf %8 : vector<16x128xf32> to vector<16x128xbf16>
    %c0_3 = arith.constant 0 : index
    %c0_4 = arith.constant 0 : index
    %c0_5 = arith.constant 0 : index
    %10 = vector.load %arg2[%c0_3, %c0_4, %c0_5] : memref<2x128x128xbf16, #tpu.memory_space<vmem>>, vector<1x128x128xbf16>
    %11 = vector.shape_cast %10 : vector<1x128x128xbf16> to vector<128x128xbf16>
    %cst_6 = arith.constant dense<0.000000e+00> : vector<16x128xf32>
    %12 = tpu.matmul %9, %11, %cst_6 {dimension_numbers = #tpu.dot_dimension_numbers<[1], [0], [0], [1], [0, 0, 1, 1], [], []>} : vector<16x128xbf16>, vector<128x128xbf16>, vector<16x128xf32> -> vector<16x128xf32>
    %c1 = arith.constant 1 : index
    %c0_7 = arith.constant 0 : index
    %c0_8 = arith.constant 0 : index
    %13 = vector.load %arg2[%c1, %c0_7, %c0_8] : memref<2x128x128xbf16, #tpu.memory_space<vmem>>, vector<1x128x128xbf16>
    %14 = vector.shape_cast %13 : vector<1x128x128xbf16> to vector<128x128xbf16>
    %cst_9 = arith.constant dense<0.000000e+00> : vector<16x128xf32>
    %15 = tpu.matmul %1, %14, %cst_9 {dimension_numbers = #tpu.dot_dimension_numbers<[1], [0], [0], [1], [0, 0, 1, 1], [], []>} : vector<16x128xbf16>, vector<128x128xbf16>, vector<16x128xf32> -> vector<16x128xf32>
    %16 = arith.addf %12, %15 : vector<16x128xf32>
    %c0_10 = arith.constant 0 : index
    %c0_11 = arith.constant 0 : index
    %17 = vector.load %arg3[%c0_10, %c0_11] : memref<1x128xf32, #tpu.memory_space<vmem>>, vector<1x128xf32>
    %18 = vector.broadcast %17 : vector<1x128xf32> to vector<16x128xf32>
    %19 = arith.addf %16, %18 : vector<16x128xf32>
    %cst_12 = arith.constant 0.000000e+00 : f32
    %20 = vector.broadcast %cst_12 : f32 to vector<16x128xf32>
    %21 = arith.maximumf %19, %20 : vector<16x128xf32>
    %22 = arith.truncf %21 : vector<16x128xf32> to vector<16x128xbf16>
    %23 = arith.extf %22 : vector<16x128xbf16> to vector<16x128xf32>
    %c1_i32_13 = arith.constant 1 : i32
    %24 = tpu.dynamic_rotate %23 by %c1_i32_13 dim 0 : vector<16x128xf32>, i32 -> vector<16x128xf32>
    %25 = tpu.iota {dimensions = array<i32: 0>} : vector<16x128xi32>
    %c1_i32_14 = arith.constant 1 : i32
    %26 = vector.broadcast %c1_i32_14 : i32 to vector<16x128xi32>
    %27 = arith.cmpi sge, %25, %26 : vector<16x128xi32>
    %cst_15 = arith.constant 0.000000e+00 : f32
    %28 = vector.broadcast %cst_15 : f32 to vector<16x128xf32>
    %29 = arith.select %27, %24, %28 : vector<16x128xi1>, vector<16x128xf32>
    %30 = arith.truncf %29 : vector<16x128xf32> to vector<16x128xbf16>
    %c0_16 = arith.constant 0 : index
    %c0_17 = arith.constant 0 : index
    %c0_18 = arith.constant 0 : index
    %31 = vector.load %arg4[%c0_16, %c0_17, %c0_18] : memref<2x128x128xbf16, #tpu.memory_space<vmem>>, vector<1x128x128xbf16>
    %32 = vector.shape_cast %31 : vector<1x128x128xbf16> to vector<128x128xbf16>
    %cst_19 = arith.constant dense<0.000000e+00> : vector<16x128xf32>
    %33 = tpu.matmul %30, %32, %cst_19 {dimension_numbers = #tpu.dot_dimension_numbers<[1], [0], [0], [1], [0, 0, 1, 1], [], []>} : vector<16x128xbf16>, vector<128x128xbf16>, vector<16x128xf32> -> vector<16x128xf32>
    %c1_20 = arith.constant 1 : index
    %c0_21 = arith.constant 0 : index
    %c0_22 = arith.constant 0 : index
    %34 = vector.load %arg4[%c1_20, %c0_21, %c0_22] : memref<2x128x128xbf16, #tpu.memory_space<vmem>>, vector<1x128x128xbf16>
    %35 = vector.shape_cast %34 : vector<1x128x128xbf16> to vector<128x128xbf16>
    %cst_23 = arith.constant dense<0.000000e+00> : vector<16x128xf32>
    %36 = tpu.matmul %22, %35, %cst_23 {dimension_numbers = #tpu.dot_dimension_numbers<[1], [0], [0], [1], [0, 0, 1, 1], [], []>} : vector<16x128xbf16>, vector<128x128xbf16>, vector<16x128xf32> -> vector<16x128xf32>
    %37 = arith.addf %33, %36 : vector<16x128xf32>
    %c0_24 = arith.constant 0 : index
    %c0_25 = arith.constant 0 : index
    %38 = vector.load %arg5[%c0_24, %c0_25] : memref<1x128xf32, #tpu.memory_space<vmem>>, vector<1x128xf32>
    %39 = vector.broadcast %38 : vector<1x128xf32> to vector<16x128xf32>
    %40 = arith.addf %37, %39 : vector<16x128xf32>
    %cst_26 = arith.constant 0.000000e+00 : f32
    %41 = vector.broadcast %cst_26 : f32 to vector<16x128xf32>
    %42 = arith.maximumf %40, %41 : vector<16x128xf32>
    %c0_27 = arith.constant 0 : index
    %c0_28 = arith.constant 0 : index
    %43 = vector.load %arg6[%c0_27, %c0_28] : memref<128x128xbf16, #tpu.memory_space<vmem>>, vector<128x128xbf16>
    %cst_29 = arith.constant dense<0.000000e+00> : vector<16x128xf32>
    %44 = tpu.matmul %1, %43, %cst_29 {dimension_numbers = #tpu.dot_dimension_numbers<[1], [0], [0], [1], [0, 0, 1, 1], [], []>} : vector<16x128xbf16>, vector<128x128xbf16>, vector<16x128xf32> -> vector<16x128xf32>
    %c0_30 = arith.constant 0 : index
    %c0_31 = arith.constant 0 : index
    %45 = vector.load %arg7[%c0_30, %c0_31] : memref<1x128xf32, #tpu.memory_space<vmem>>, vector<1x128xf32>
    %46 = vector.broadcast %45 : vector<1x128xf32> to vector<16x128xf32>
    %47 = arith.addf %44, %46 : vector<16x128xf32>
    %48 = arith.addf %42, %47 : vector<16x128xf32>
    %cst_32 = arith.constant 0.000000e+00 : f32
    %49 = vector.broadcast %cst_32 : f32 to vector<16x128xf32>
    %50 = arith.maximumf %48, %49 : vector<16x128xf32>
    %51 = arith.truncf %50 : vector<16x128xf32> to vector<16x128xbf16>
    %52 = arith.extf %51 : vector<16x128xbf16> to vector<16x128xf32>
    %c2_i32 = arith.constant 2 : i32
    %53 = tpu.dynamic_rotate %52 by %c2_i32 dim 0 : vector<16x128xf32>, i32 -> vector<16x128xf32>
    %54 = tpu.iota {dimensions = array<i32: 0>} : vector<16x128xi32>
    %c2_i32_33 = arith.constant 2 : i32
    %55 = vector.broadcast %c2_i32_33 : i32 to vector<16x128xi32>
    %56 = arith.cmpi sge, %54, %55 : vector<16x128xi32>
    %cst_34 = arith.constant 0.000000e+00 : f32
    %57 = vector.broadcast %cst_34 : f32 to vector<16x128xf32>
    %58 = arith.select %56, %53, %57 : vector<16x128xi1>, vector<16x128xf32>
    %59 = arith.truncf %58 : vector<16x128xf32> to vector<16x128xbf16>
    %c0_35 = arith.constant 0 : index
    %c0_36 = arith.constant 0 : index
    %c0_37 = arith.constant 0 : index
    %60 = vector.load %arg8[%c0_35, %c0_36, %c0_37] : memref<2x128x128xbf16, #tpu.memory_space<vmem>>, vector<1x128x128xbf16>
    %61 = vector.shape_cast %60 : vector<1x128x128xbf16> to vector<128x128xbf16>
    %cst_38 = arith.constant dense<0.000000e+00> : vector<16x128xf32>
    %62 = tpu.matmul %59, %61, %cst_38 {dimension_numbers = #tpu.dot_dimension_numbers<[1], [0], [0], [1], [0, 0, 1, 1], [], []>} : vector<16x128xbf16>, vector<128x128xbf16>, vector<16x128xf32> -> vector<16x128xf32>
    %c1_39 = arith.constant 1 : index
    %c0_40 = arith.constant 0 : index
    %c0_41 = arith.constant 0 : index
    %63 = vector.load %arg8[%c1_39, %c0_40, %c0_41] : memref<2x128x128xbf16, #tpu.memory_space<vmem>>, vector<1x128x128xbf16>
    %64 = vector.shape_cast %63 : vector<1x128x128xbf16> to vector<128x128xbf16>
    %cst_42 = arith.constant dense<0.000000e+00> : vector<16x128xf32>
    %65 = tpu.matmul %51, %64, %cst_42 {dimension_numbers = #tpu.dot_dimension_numbers<[1], [0], [0], [1], [0, 0, 1, 1], [], []>} : vector<16x128xbf16>, vector<128x128xbf16>, vector<16x128xf32> -> vector<16x128xf32>
    %66 = arith.addf %62, %65 : vector<16x128xf32>
    %c0_43 = arith.constant 0 : index
    %c0_44 = arith.constant 0 : index
    %67 = vector.load %arg9[%c0_43, %c0_44] : memref<1x128xf32, #tpu.memory_space<vmem>>, vector<1x128xf32>
    %68 = vector.broadcast %67 : vector<1x128xf32> to vector<16x128xf32>
    %69 = arith.addf %66, %68 : vector<16x128xf32>
    %cst_45 = arith.constant 0.000000e+00 : f32
    %70 = vector.broadcast %cst_45 : f32 to vector<16x128xf32>
    %71 = arith.maximumf %69, %70 : vector<16x128xf32>
    %72 = arith.truncf %71 : vector<16x128xf32> to vector<16x128xbf16>
    %73 = arith.extf %72 : vector<16x128xbf16> to vector<16x128xf32>
    %c2_i32_46 = arith.constant 2 : i32
    %74 = tpu.dynamic_rotate %73 by %c2_i32_46 dim 0 : vector<16x128xf32>, i32 -> vector<16x128xf32>
    %75 = tpu.iota {dimensions = array<i32: 0>} : vector<16x128xi32>
    %c2_i32_47 = arith.constant 2 : i32
    %76 = vector.broadcast %c2_i32_47 : i32 to vector<16x128xi32>
    %77 = arith.cmpi sge, %75, %76 : vector<16x128xi32>
    %cst_48 = arith.constant 0.000000e+00 : f32
    %78 = vector.broadcast %cst_48 : f32 to vector<16x128xf32>
    %79 = arith.select %77, %74, %78 : vector<16x128xi1>, vector<16x128xf32>
    %80 = arith.truncf %79 : vector<16x128xf32> to vector<16x128xbf16>
    %c0_49 = arith.constant 0 : index
    %c0_50 = arith.constant 0 : index
    %c0_51 = arith.constant 0 : index
    %81 = vector.load %arg10[%c0_49, %c0_50, %c0_51] : memref<2x128x128xbf16, #tpu.memory_space<vmem>>, vector<1x128x128xbf16>
    %82 = vector.shape_cast %81 : vector<1x128x128xbf16> to vector<128x128xbf16>
    %cst_52 = arith.constant dense<0.000000e+00> : vector<16x128xf32>
    %83 = tpu.matmul %80, %82, %cst_52 {dimension_numbers = #tpu.dot_dimension_numbers<[1], [0], [0], [1], [0, 0, 1, 1], [], []>} : vector<16x128xbf16>, vector<128x128xbf16>, vector<16x128xf32> -> vector<16x128xf32>
    %c1_53 = arith.constant 1 : index
    %c0_54 = arith.constant 0 : index
    %c0_55 = arith.constant 0 : index
    %84 = vector.load %arg10[%c1_53, %c0_54, %c0_55] : memref<2x128x128xbf16, #tpu.memory_space<vmem>>, vector<1x128x128xbf16>
    %85 = vector.shape_cast %84 : vector<1x128x128xbf16> to vector<128x128xbf16>
    %cst_56 = arith.constant dense<0.000000e+00> : vector<16x128xf32>
    %86 = tpu.matmul %72, %85, %cst_56 {dimension_numbers = #tpu.dot_dimension_numbers<[1], [0], [0], [1], [0, 0, 1, 1], [], []>} : vector<16x128xbf16>, vector<128x128xbf16>, vector<16x128xf32> -> vector<16x128xf32>
    %87 = arith.addf %83, %86 : vector<16x128xf32>
    %c0_57 = arith.constant 0 : index
    %c0_58 = arith.constant 0 : index
    %88 = vector.load %arg11[%c0_57, %c0_58] : memref<1x128xf32, #tpu.memory_space<vmem>>, vector<1x128xf32>
    %89 = vector.broadcast %88 : vector<1x128xf32> to vector<16x128xf32>
    %90 = arith.addf %87, %89 : vector<16x128xf32>
    %cst_59 = arith.constant 0.000000e+00 : f32
    %91 = vector.broadcast %cst_59 : f32 to vector<16x128xf32>
    %92 = arith.maximumf %90, %91 : vector<16x128xf32>
    %93 = arith.extf %51 : vector<16x128xbf16> to vector<16x128xf32>
    %94 = arith.addf %92, %93 : vector<16x128xf32>
    %cst_60 = arith.constant 0.000000e+00 : f32
    %95 = vector.broadcast %cst_60 : f32 to vector<16x128xf32>
    %96 = arith.maximumf %94, %95 : vector<16x128xf32>
    %97 = arith.truncf %96 : vector<16x128xf32> to vector<16x128xbf16>
    %98 = arith.extf %97 : vector<16x128xbf16> to vector<16x128xf32>
    %cst_61 = arith.constant dense<0.000000e+00> : vector<128xf32>
    %99 = vector.multi_reduction <add>, %98, %cst_61 [0] : vector<16x128xf32> to vector<128xf32>
    %100 = vector.shape_cast %99 : vector<128xf32> to vector<1x128xf32>
    %cst_62 = arith.constant 1.600000e+01 : f32
    %101 = vector.broadcast %cst_62 : f32 to vector<1x128xf32>
    %102 = arith.divf %100, %101 : vector<1x128xf32>
    %103 = arith.truncf %102 : vector<1x128xf32> to vector<1x128xbf16>
    %c0_63 = arith.constant 0 : index
    %c0_64 = arith.constant 0 : index
    %104 = vector.load %arg12[%c0_63, %c0_64] : memref<128x128xbf16, #tpu.memory_space<vmem>>, vector<128x128xbf16>
    %cst_65 = arith.constant dense<0.000000e+00> : vector<1x128xf32>
    %105 = tpu.matmul %103, %104, %cst_65 {dimension_numbers = #tpu.dot_dimension_numbers<[1], [0], [0], [1], [0, 0, 1, 1], [], []>} : vector<1x128xbf16>, vector<128x128xbf16>, vector<1x128xf32> -> vector<1x128xf32>
    %c0_66 = arith.constant 0 : index
    %c0_67 = arith.constant 0 : index
    %106 = vector.load %arg13[%c0_66, %c0_67] : memref<1x128xf32, #tpu.memory_space<vmem>>, vector<1x128xf32>
    %107 = arith.addf %105, %106 : vector<1x128xf32>
    %108 = tpu.iota {dimensions = array<i32: 1>} : vector<1x128xi32>
    %c4_i32 = arith.constant 4 : i32
    %109 = vector.broadcast %c4_i32 : i32 to vector<1x128xi32>
    %110 = arith.cmpi slt, %108, %109 : vector<1x128xi32>
    %cst_68 = arith.constant -1.000000e+30 : f32
    %111 = vector.broadcast %cst_68 : f32 to vector<1x128xf32>
    %112 = arith.select %110, %107, %111 : vector<1x128xi1>, vector<1x128xf32>
    %cst_69 = arith.constant dense<0xFF800000> : vector<1xf32>
    %113 = vector.multi_reduction <maximumf>, %112, %cst_69 [1] : vector<1x128xf32> to vector<1xf32>
    %114 = vector.shape_cast %113 : vector<1xf32> to vector<1x1xf32>
    %115 = vector.broadcast %114 : vector<1x1xf32> to vector<1x128xf32>
    %116 = arith.subf %112, %115 : vector<1x128xf32>
    %117 = math.exp %116 : vector<1x128xf32>
    %cst_70 = arith.constant dense<0.000000e+00> : vector<1xf32>
    %118 = vector.multi_reduction <add>, %117, %cst_70 [1] : vector<1x128xf32> to vector<1xf32>
    %119 = vector.shape_cast %118 : vector<1xf32> to vector<1x1xf32>
    %120 = math.log %119 : vector<1x1xf32>
    %121 = vector.broadcast %120 : vector<1x1xf32> to vector<1x128xf32>
    %122 = arith.subf %116, %121 : vector<1x128xf32>
    %c0_71 = arith.constant 0 : index
    %c0_72 = arith.constant 0 : index
    %c0_73 = arith.constant 0 : index
    %123 = vector.load %arg14[%c0_71, %c0_72, %c0_73] : memref<1x1x128xf32, #tpu.memory_space<vmem>>, vector<1x1x128xf32>
    %124 = vector.shape_cast %123 : vector<1x1x128xf32> to vector<1x128xf32>
    %125 = vector.shape_cast %122 : vector<1x128xf32> to vector<1x1x128xf32>
    tpu.vector_store %arg14[%c0_71, %c0_72, %c0_73], %125 {strides = array<i32>} : memref<1x1x128xf32, #tpu.memory_space<vmem>>, vector<1x1x128xf32>,
    return
  }
  func.func @transform_0(%arg0: i32) -> (i32, i32, i32) {
    %c0_i32 = arith.constant 0 : i32
    %c0_i32_0 = arith.constant 0 : i32
    %c0_i32_1 = arith.constant 0 : i32
    return %arg0, %c0_i32, %c0_i32_0 : i32, i32, i32
  }
  func.func @transform_1(%arg0: i32) -> (i32, i32, i32) {
    %c0_i32 = arith.constant 0 : i32
    %c0_i32_0 = arith.constant 0 : i32
    %c0_i32_1 = arith.constant 0 : i32
    %c0_i32_2 = arith.constant 0 : i32
    return %c0_i32, %c0_i32_0, %c0_i32_1 : i32, i32, i32
  }
  func.func @transform_2(%arg0: i32) -> (i32, i32) {
    %c0_i32 = arith.constant 0 : i32
    %c0_i32_0 = arith.constant 0 : i32
    %c0_i32_1 = arith.constant 0 : i32
    return %c0_i32, %c0_i32_0 : i32, i32
  }
  func.func @transform_3(%arg0: i32) -> (i32, i32, i32) {
    %c0_i32 = arith.constant 0 : i32
    %c0_i32_0 = arith.constant 0 : i32
    %c0_i32_1 = arith.constant 0 : i32
    %c0_i32_2 = arith.constant 0 : i32
    return %c0_i32, %c0_i32_0, %c0_i32_1 : i32, i32, i32
  }
  func.func @transform_4(%arg0: i32) -> (i32, i32) {
    %c0_i32 = arith.constant 0 : i32
    %c0_i32_0 = arith.constant 0 : i32
    %c0_i32_1 = arith.constant 0 : i32
    return %c0_i32, %c0_i32_0 : i32, i32
  }
  func.func @transform_5(%arg0: i32) -> (i32, i32) {
    %c0_i32 = arith.constant 0 : i32
    %c0_i32_0 = arith.constant 0 : i32
    %c0_i32_1 = arith.constant 0 : i32
    return %c0_i32, %c0_i32_0 : i32, i32
  }
  func.func @transform_6(%arg0: i32) -> (i32, i32) {
    %c0_i32 = arith.constant 0 : i32
    %c0_i32_0 = arith.constant 0 : i32
    %c0_i32_1 = arith.constant 0 : i32
    return %c0_i32, %c0_i32_0 : i32, i32
  }
  func.func @transform_7(%arg0: i32) -> (i32, i32, i32) {
    %c0_i32 = arith.constant 0 : i32
    %c0_i32_0 = arith.constant 0 : i32
    %c0_i32_1 = arith.constant 0 : i32
    %c0_i32_2 = arith.constant 0 : i32
    return %c0_i32, %c0_i32_0, %c0_i32_1 : i32, i32, i32
  }
  func.func @transform_8(%arg0: i32) -> (i32, i32) {
    %c0_i32 = arith.constant 0 : i32
    %c0_i32_0 = arith.constant 0 : i32
    %c0_i32_1 = arith.constant 0 : i32
    return %c0_i32, %c0_i32_0 : i32, i32
  }
  func.func @transform_9(%arg0: i32) -> (i32, i32, i32) {
    %c0_i32 = arith.constant 0 : i32
    %c0_i32_0 = arith.constant 0 : i32
    %c0_i32_1 = arith.constant 0 : i32
    %c0_i32_2 = arith.constant 0 : i32
    return %c0_i32, %c0_i32_0, %c0_i32_1 : i32, i32, i32
  }
  func.func @transform_10(%arg0: i32) -> (i32, i32) {
    %c0_i32 = arith.constant 0 : i32
    %c0_i32_0 = arith.constant 0 : i32
    %c0_i32_1 = arith.constant 0 : i32
    return %c0_i32, %c0_i32_0 : i32, i32
  }
  func.func @transform_11(%arg0: i32) -> (i32, i32) {
    %c0_i32 = arith.constant 0 : i32
    %c0_i32_0 = arith.constant 0 : i32
    %c0_i32_1 = arith.constant 0 : i32
    return %c0_i32, %c0_i32_0 : i32, i32
  }
  func.func @transform_12(%arg0: i32) -> (i32, i32) {
    %c0_i32 = arith.constant 0 : i32
    %c0_i32_0 = arith.constant 0 : i32
    %c0_i32_1 = arith.constant 0 : i32
    return %c0_i32, %c0_i32_0 : i32, i32
  }
  func.func @transform_13(%arg0: i32) -> (i32, i32, i32) {
    %c0_i32 = arith.constant 0 : i32
    %c0_i32_0 = arith.constant 0 : i32
    %c0_i32_1 = arith.constant 0 : i32
    return %arg0, %c0_i32, %c0_i32_0 : i32, i32, i32
  }
}

</mosaic_0001>

<llo_original>
// kernel: tpu_custom_call.1
$region0: #{tpu_custom_call.1}
  #allocation0 [shape = 'u32[]', space=smem, size = 0x4, offset = 0x4, fixed_abs, tag = 'smem constant byte address 0x4 - core index']
  #allocation1 [shape = 'u32[144,128]{1,0:T(1,128)}', space=vmem, size = 0x12000, scoped, tag = 'internal scratch']
  %s0 = inlined_call_operand.hbm [shape: bf16[2,16,128], index: 0, kind: input, shape index: {}]
  %s1 = inlined_call_operand.hbm [shape: bf16[2,128,128], index: 1, kind: input, shape index: {}]
  %s2 = inlined_call_operand.vmem [shape: f32[1,128], index: 2, kind: input, shape index: {}]
  %s3 = inlined_call_operand.hbm [shape: bf16[2,128,128], index: 3, kind: input, shape index: {}]
  %s4 = inlined_call_operand.vmem [shape: f32[1,128], index: 4, kind: input, shape index: {}]
  %s5 = inlined_call_operand.hbm [shape: bf16[128,128], index: 5, kind: input, shape index: {}]
  %s6 = inlined_call_operand.vmem [shape: f32[1,128], index: 6, kind: input, shape index: {}]
  %s7 = inlined_call_operand.hbm [shape: bf16[2,128,128], index: 7, kind: input, shape index: {}]
  %s8 = inlined_call_operand.vmem [shape: f32[1,128], index: 8, kind: input, shape index: {}]
  %s9 = inlined_call_operand.hbm [shape: bf16[2,128,128], index: 9, kind: input, shape index: {}]
  %s10 = inlined_call_operand.vmem [shape: f32[1,128], index: 10, kind: input, shape index: {}]
  %s11 = inlined_call_operand.hbm [shape: bf16[128,128], index: 11, kind: input, shape index: {}]
  %s12 = inlined_call_operand.vmem [shape: f32[1,128], index: 12, kind: input, shape index: {}]
  %s13 = inlined_call_operand.hbm [shape: f32[2,1,128], index: 13, kind: output, shape index: {}]
  %s14 = sld [smem:[#allocation0]]
  $region113: #{tpu_custom_call.1} parent=0
    _
  %s16 = ssub.s32 1, %s14
  %s17 = scalar_select 0, %s16, %s14
  $region1: #{tpu_custom_call.1} parent=0
    #allocation2 [shape = 'u8[8192]{0}', space=vmem, size = 0x2000, scoped, tag = 'input window, operand 0']
    #allocation3 [shape = 's32[2]{0}', space=sflag, size = 0x8, scoped, tag = 'scoped memory for tpu_custom_call.1']
    #allocation4 [shape = 's32[2]{0}', space=sflag, size = 0x8, scoped, tag = 'scoped memory for tpu_custom_call.1']
    #allocation5 [shape = 'u8[65536]{0}', space=vmem, size = 0x10000, scoped, tag = 'input window, operand 1, single buffered']
    #allocation6 [shape = 's32[1]{0}', space=sflag, size = 0x4, scoped, tag = 'scoped memory for tpu_custom_call.1']
    #allocation7 [shape = 'u8[65536]{0}', space=vmem, size = 0x10000, scoped, tag = 'input window, operand 3, single buffered']
    #allocation8 [shape = 'u8[32768]{0}', space=vmem, size = 0x8000, scoped, tag = 'input window, operand 5, single buffered']
    #allocation9 [shape = 's32[1]{0}', space=sflag, size = 0x4, scoped, tag = 'scoped memory for tpu_custom_call.1']
    #allocation10 [shape = 'u8[65536]{0}', space=vmem, size = 0x10000, scoped, tag = 'input window, operand 7, single buffered']
    #allocation11 [shape = 'u8[65536]{0}', space=vmem, size = 0x10000, scoped, tag = 'input window, operand 9, single buffered']
    #allocation12 [shape = 's32[1]{0}', space=sflag, size = 0x4, scoped, tag = 'scoped memory for tpu_custom_call.1']
    #allocation13 [shape = 'u8[32768]{0}', space=vmem, size = 0x8000, scoped, tag = 'input window, operand 11, single buffered']
    #allocation14 [shape = 'u8[1024]{0}', space=vmem, size = 0x400, scoped, tag = 'output window, operand 0']
    %18 = vsyncpa [#allocation3], 0
    %s19 = scalar_lea.sflag [#allocation3], 1
    %20 = vsyncpa %s19, 0
    %21 = vsyncpa [#allocation6], 0
    %22 = vsyncpa [#allocation9], 0
    %23 = vsyncpa [#allocation12], 0
    %24 = vsyncpa [#allocation4], 0
    %s25 = scalar_lea.sflag [#allocation4], 1
    %26 = vsyncpa %s25, 0
    loop: start=0, step=1, limit=4
    $region2: #{tpu_custom_call.1} parent=1 // loop_pre_header
      _
    $region3: #{tpu_custom_call.1} parent=1 // loop_header
      %s28 = sphi 0, %s32
      %p29 = scmp.ge.s32.totalorder %s28, 4
      %s38 = sphi 0, %s40
      %s41 = sphi 0, %s38
      %s42 = sphi 0, %s41
      %s58 = sphi 0, %s42
      %s62 = sphi 0, %s62
      %s64 = sphi 0, %s62
      %s65 = sphi 0, %s64
      %s79 = sphi 0, %s65
      %s83 = sphi 0, %s83
      %s85 = sphi 0, %s83
      %s86 = sphi 0, %s85
      %s100 = sphi 0, %s86
      %s104 = sphi 0, %s104
      %s106 = sphi 0, %s104
      %s107 = sphi 0, %s106
      %s121 = sphi 0, %s107
      %s125 = sphi 0, %s125
      %s127 = sphi 0, %s125
      %s128 = sphi 0, %s127
      %s142 = sphi 0, %s128
      %s146 = sphi 0, %s146
      %s148 = sphi 0, %s146
      %s149 = sphi 0, %s148
      %s163 = sphi 0, %s149
      %s167 = sphi 0, %s167
      %s169 = sphi 0, %s167
      %s170 = sphi 0, %s169
      %s184 = sphi 0, %s170
      %s188 = sphi 0, %s188
      %s190 = sphi 0, %s188
      %s191 = sphi 0, %s190
      %s205 = sphi 0, %s191
      %s209 = sphi 0, %s209
      %s211 = sphi 0, %s209
      %s212 = sphi 0, %s211
      %s226 = sphi 0, %s212
      %s230 = sphi 0, %s230
      %s232 = sphi 0, %s230
      %s233 = sphi 0, %s232
      %s247 = sphi 0, %s233
      %s251 = sphi 0, %s251
      %s253 = sphi 0, %s251
      %s254 = sphi 0, %s253
      %s268 = sphi 0, %s254
      %s272 = sphi 0, %s272
      %s274 = sphi 0, %s272
      %s275 = sphi 0, %s274
      %s289 = sphi 0, %s275
      %s293 = sphi 0, %s293
      %s295 = sphi 0, %s293
      %s296 = sphi 0, %s295
      %s310 = sphi 0, %s296
      %s316 = sphi 0, %s318
      %s319 = sphi 0, %s316
      %s320 = sphi 0, %s319
      %s336 = sphi 0, %s320
    $region4: #{tpu_custom_call.1} parent=1 // loop_header_branch
      %31 = sbr.rel (%p29) target = $region8
    $region5: #{tpu_custom_call.1} parent=1 // loop_body
      %s33 = ssub.s32 %s28, 1
      %s34 = ssub.s32 %s28, 2
      %s35 = sadd.s32 %s28, 1
      %s36 = ssub.s32 %s28, %s35
      %p37 = scmp.eq.s32.totalorder %s36, 0
      %s39 = sadd.s32 %s38, 1
      %s40 = scalar_select %p37, %s38, %s39
      %p43 = pneg %p37
      %p44 = scmp.eq.s32.totalorder %s28, 1
      %p45 = por %p43, %p44
      %p46 = scmp.ne.s32.totalorder %s38, %s41
      %p47 = scmp.eq.s32.totalorder %s28, 0
      %p48 = por %p46, %p47
      %p49 = scmp.ne.s32.totalorder %s38, %s41
      %p50 = scmp.eq.s32.totalorder %s33, 1
      %p51 = por %p49, %p50
      %p52 = scmp.ne.s32.totalorder %s41, %s42
      %p53 = scmp.eq.s32.totalorder %s33, 0
      %p54 = por %p52, %p53
      %p55 = scmp.ne.s32.totalorder %s41, %s42
      %p56 = scmp.eq.s32.totalorder %s34, 1
      %p57 = por %p55, %p56
      %p59 = scmp.ne.s32.totalorder %s42, %s58
      %p60 = scmp.eq.s32.totalorder %s34, 0
      %p61 = por %p59, %p60
      %s63 = sadd.s32 %s62, 1
      %p66 = scmp.eq.s32.totalorder %s28, 1
      %p67 = scmp.ne.s32.totalorder %s62, %s64
      %p68 = scmp.eq.s32.totalorder %s28, 0
      %p69 = por %p67, %p68
      %p70 = scmp.ne.s32.totalorder %s62, %s64
      %p71 = scmp.eq.s32.totalorder %s33, 1
      %p72 = por %p70, %p71
      %p73 = scmp.ne.s32.totalorder %s64, %s65
      %p74 = scmp.eq.s32.totalorder %s33, 0
      %p75 = por %p73, %p74
      %p76 = scmp.ne.s32.totalorder %s64, %s65
      %p77 = scmp.eq.s32.totalorder %s34, 1
      %p78 = por %p76, %p77
      %p80 = scmp.ne.s32.totalorder %s65, %s79
      %p81 = scmp.eq.s32.totalorder %s34, 0
      %p82 = por %p80, %p81
      %s84 = sadd.s32 %s83, 1
      %p87 = scmp.eq.s32.totalorder %s28, 1
      %p88 = scmp.ne.s32.totalorder %s83, %s85
      %p89 = scmp.eq.s32.totalorder %s28, 0
      %p90 = por %p88, %p89
      %p91 = scmp.ne.s32.totalorder %s83, %s85
      %p92 = scmp.eq.s32.totalorder %s33, 1
      %p93 = por %p91, %p92
      %p94 = scmp.ne.s32.totalorder %s85, %s86
      %p95 = scmp.eq.s32.totalorder %s33, 0
      %p96 = por %p94, %p95
      %p97 = scmp.ne.s32.totalorder %s85, %s86
      %p98 = scmp.eq.s32.totalorder %s34, 1
      %p99 = por %p97, %p98
      %p101 = scmp.ne.s32.totalorder %s86, %s100
      %p102 = scmp.eq.s32.totalorder %s34, 0
      %p103 = por %p101, %p102
      %s105 = sadd.s32 %s104, 1
      %p108 = scmp.eq.s32.totalorder %s28, 1
      %p109 = scmp.ne.s32.totalorder %s104, %s106
      %p110 = scmp.eq.s32.totalorder %s28, 0
      %p111 = por %p109, %p110
      %p112 = scmp.ne.s32.totalorder %s104, %s106
      %p113 = scmp.eq.s32.totalorder %s33, 1
      %p114 = por %p112, %p113
      %p115 = scmp.ne.s32.totalorder %s106, %s107
      %p116 = scmp.eq.s32.totalorder %s33, 0
      %p117 = por %p115, %p116
      %p118 = scmp.ne.s32.totalorder %s106, %s107
      %p119 = scmp.eq.s32.totalorder %s34, 1
      %p120 = por %p118, %p119
      %p122 = scmp.ne.s32.totalorder %s107, %s121
      %p123 = scmp.eq.s32.totalorder %s34, 0
      %p124 = por %p122, %p123
      %s126 = sadd.s32 %s125, 1
      %p129 = scmp.eq.s32.totalorder %s28, 1
      %p130 = scmp.ne.s32.totalorder %s125, %s127
      %p131 = scmp.eq.s32.totalorder %s28, 0
      %p132 = por %p130, %p131
      %p133 = scmp.ne.s32.totalorder %s125, %s127
      %p134 = scmp.eq.s32.totalorder %s33, 1
      %p135 = por %p133, %p134
      %p136 = scmp.ne.s32.totalorder %s127, %s128
      %p137 = scmp.eq.s32.totalorder %s33, 0
      %p138 = por %p136, %p137
      %p139 = scmp.ne.s32.totalorder %s127, %s128
      %p140 = scmp.eq.s32.totalorder %s34, 1
      %p141 = por %p139, %p140
      %p143 = scmp.ne.s32.totalorder %s128, %s142
      %p144 = scmp.eq.s32.totalorder %s34, 0
      %p145 = por %p143, %p144
      %s147 = sadd.s32 %s146, 1
      %p150 = scmp.eq.s32.totalorder %s28, 1
      %p151 = scmp.ne.s32.totalorder %s146, %s148
      %p152 = scmp.eq.s32.totalorder %s28, 0
      %p153 = por %p151, %p152
      %p154 = scmp.ne.s32.totalorder %s146, %s148
      %p155 = scmp.eq.s32.totalorder %s33, 1
      %p156 = por %p154, %p155
      %p157 = scmp.ne.s32.totalorder %s148, %s149
      %p158 = scmp.eq.s32.totalorder %s33, 0
      %p159 = por %p157, %p158
      %p160 = scmp.ne.s32.totalorder %s148, %s149
      %p161 = scmp.eq.s32.totalorder %s34, 1
      %p162 = por %p160, %p161
      %p164 = scmp.ne.s32.totalorder %s149, %s163
      %p165 = scmp.eq.s32.totalorder %s34, 0
      %p166 = por %p164, %p165
      %s168 = sadd.s32 %s167, 1
      %p171 = scmp.eq.s32.totalorder %s28, 1
      %p172 = scmp.ne.s32.totalorder %s167, %s169
      %p173 = scmp.eq.s32.totalorder %s28, 0
      %p174 = por %p172, %p173
      %p175 = scmp.ne.s32.totalorder %s167, %s169
      %p176 = scmp.eq.s32.totalorder %s33, 1
      %p177 = por %p175, %p176
      %p178 = scmp.ne.s32.totalorder %s169, %s170
      %p179 = scmp.eq.s32.totalorder %s33, 0
      %p180 = por %p178, %p179
      %p181 = scmp.ne.s32.totalorder %s169, %s170
      %p182 = scmp.eq.s32.totalorder %s34, 1
      %p183 = por %p181, %p182
      %p185 = scmp.ne.s32.totalorder %s170, %s184
      %p186 = scmp.eq.s32.totalorder %s34, 0
      %p187 = por %p185, %p186
      %s189 = sadd.s32 %s188, 1
      %p192 = scmp.eq.s32.totalorder %s28, 1
      %p193 = scmp.ne.s32.totalorder %s188, %s190
      %p194 = scmp.eq.s32.totalorder %s28, 0
      %p195 = por %p193, %p194
      %p196 = scmp.ne.s32.totalorder %s188, %s190
      %p197 = scmp.eq.s32.totalorder %s33, 1
      %p198 = por %p196, %p197
      %p199 = scmp.ne.s32.totalorder %s190, %s191
      %p200 = scmp.eq.s32.totalorder %s33, 0
      %p201 = por %p199, %p200
      %p202 = scmp.ne.s32.totalorder %s190, %s191
      %p203 = scmp.eq.s32.totalorder %s34, 1
      %p204 = por %p202, %p203
      %p206 = scmp.ne.s32.totalorder %s191, %s205
      %p207 = scmp.eq.s32.totalorder %s34, 0
      %p208 = por %p206, %p207
      %s210 = sadd.s32 %s209, 1
      %p213 = scmp.eq.s32.totalorder %s28, 1
      %p214 = scmp.ne.s32.totalorder %s209, %s211
      %p215 = scmp.eq.s32.totalorder %s28, 0
      %p216 = por %p214, %p215
      %p217 = scmp.ne.s32.totalorder %s209, %s211
      %p218 = scmp.eq.s32.totalorder %s33, 1
      %p219 = por %p217, %p218
      %p220 = scmp.ne.s32.totalorder %s211, %s212
      %p221 = scmp.eq.s32.totalorder %s33, 0
      %p222 = por %p220, %p221
      %p223 = scmp.ne.s32.totalorder %s211, %s212
      %p224 = scmp.eq.s32.totalorder %s34, 1
      %p225 = por %p223, %p224
      %p227 = scmp.ne.s32.totalorder %s212, %s226
      %p228 = scmp.eq.s32.totalorder %s34, 0
      %p229 = por %p227, %p228
      %s231 = sadd.s32 %s230, 1
      %p234 = scmp.eq.s32.totalorder %s28, 1
      %p235 = scmp.ne.s32.totalorder %s230, %s232
      %p236 = scmp.eq.s32.totalorder %s28, 0
      %p237 = por %p235, %p236
      %p238 = scmp.ne.s32.totalorder %s230, %s232
      %p239 = scmp.eq.s32.totalorder %s33, 1
      %p240 = por %p238, %p239
      %p241 = scmp.ne.s32.totalorder %s232, %s233
      %p242 = scmp.eq.s32.totalorder %s33, 0
      %p243 = por %p241, %p242
      %p244 = scmp.ne.s32.totalorder %s232, %s233
      %p245 = scmp.eq.s32.totalorder %s34, 1
      %p246 = por %p244, %p245
      %p248 = scmp.ne.s32.totalorder %s233, %s247
      %p249 = scmp.eq.s32.totalorder %s34, 0
      %p250 = por %p248, %p249
      %s252 = sadd.s32 %s251, 1
      %p255 = scmp.eq.s32.totalorder %s28, 1
      %p256 = scmp.ne.s32.totalorder %s251, %s253
      %p257 = scmp.eq.s32.totalorder %s28, 0
      %p258 = por %p256, %p257
      %p259 = scmp.ne.s32.totalorder %s251, %s253
      %p260 = scmp.eq.s32.totalorder %s33, 1
      %p261 = por %p259, %p260
      %p262 = scmp.ne.s32.totalorder %s253, %s254
      %p263 = scmp.eq.s32.totalorder %s33, 0
      %p264 = por %p262, %p263
      %p265 = scmp.ne.s32.totalorder %s253, %s254
      %p266 = scmp.eq.s32.totalorder %s34, 1
      %p267 = por %p265, %p266
      %p269 = scmp.ne.s32.totalorder %s254, %s268
      %p270 = scmp.eq.s32.totalorder %s34, 0
      %p271 = por %p269, %p270
      %s273 = sadd.s32 %s272, 1
      %p276 = scmp.eq.s32.totalorder %s28, 1
      %p277 = scmp.ne.s32.totalorder %s272, %s274
      %p278 = scmp.eq.s32.totalorder %s28, 0
      %p279 = por %p277, %p278
      %p280 = scmp.ne.s32.totalorder %s272, %s274
      %p281 = scmp.eq.s32.totalorder %s33, 1
      %p282 = por %p280, %p281
      %p283 = scmp.ne.s32.totalorder %s274, %s275
      %p284 = scmp.eq.s32.totalorder %s33, 0
      %p285 = por %p283, %p284
      %p286 = scmp.ne.s32.totalorder %s274, %s275
      %p287 = scmp.eq.s32.totalorder %s34, 1
      %p288 = por %p286, %p287
      %p290 = scmp.ne.s32.totalorder %s275, %s289
      %p291 = scmp.eq.s32.totalorder %s34, 0
      %p292 = por %p290, %p291
      %s294 = sadd.s32 %s293, 1
      %p297 = scmp.eq.s32.totalorder %s28, 1
      %p298 = scmp.ne.s32.totalorder %s293, %s295
      %p299 = scmp.eq.s32.totalorder %s28, 0
      %p300 = por %p298, %p299
      %p301 = scmp.ne.s32.totalorder %s293, %s295
      %p302 = scmp.eq.s32.totalorder %s33, 1
      %p303 = por %p301, %p302
      %p304 = scmp.ne.s32.totalorder %s295, %s296
      %p305 = scmp.eq.s32.totalorder %s33, 0
      %p306 = por %p304, %p305
      %p307 = scmp.ne.s32.totalorder %s295, %s296
      %p308 = scmp.eq.s32.totalorder %s34, 1
      %p309 = por %p307, %p308
      %p311 = scmp.ne.s32.totalorder %s296, %s310
      %p312 = scmp.eq.s32.totalorder %s34, 0
      %p313 = por %p311, %p312
      %s314 = ssub.s32 %s28, %s35
      %p315 = scmp.eq.s32.totalorder %s314, 0
      %s317 = sadd.s32 %s316, 1
      %s318 = scalar_select %p315, %s316, %s317
      %p321 = pneg %p315
      %p322 = scmp.eq.s32.totalorder %s28, 1
      %p323 = por %p321, %p322
      %p324 = scmp.ne.s32.totalorder %s316, %s319
      %p325 = scmp.eq.s32.totalorder %s28, 0
      %p326 = por %p324, %p325
      %p327 = scmp.ne.s32.totalorder %s316, %s319
      %p328 = scmp.eq.s32.totalorder %s33, 1
      %p329 = por %p327, %p328
      %p330 = scmp.ne.s32.totalorder %s319, %s320
      %p331 = scmp.eq.s32.totalorder %s33, 0
      %p332 = por %p330, %p331
      %p333 = scmp.ne.s32.totalorder %s319, %s320
      %p334 = scmp.eq.s32.totalorder %s34, 1
      %p335 = por %p333, %p334
      %p337 = scmp.ne.s32.totalorder %s320, %s336
      %p338 = scmp.eq.s32.totalorder %s34, 0
      %p339 = por %p337, %p338
      %p340 = scmp.le.s32.totalorder 1, %s28
      %p341 = scmp.lt.s32.totalorder %s28, 3
      %p342 = pnand %p340, %p341
      %p343 = pneg %p342
      // Predicated region
      $region9: #{tpu_custom_call.1} parent=5 // pred_check
        _
      $region10: #{tpu_custom_call.1} parent=5 // pred_check_branch
        %345 = sbr.rel (%p342) target = $region12
      $region11: #{tpu_custom_call.1} parent=5 // pred_region
        %s346 = ssub.s32 %s28, 1
        // Predicated region
        $region13: #{tpu_custom_call.1} parent=11 // pred_check
          %p347 = pneg %p75
        $region14: #{tpu_custom_call.1} parent=11 // pred_check_branch
          %349 = sbr.rel (%p347) target = $region16
        $region15: #{tpu_custom_call.1} parent=11 // pred_region
          %s351 = ssub.s32 2048, 2048
          %352 = vsyncadd [#allocation6], %s351
          %s353 = sshll.u32 [#allocation5], 4
          %s354 = int_to_ptr.vmem [resolvable:$true] %s353
          %359 = dma.hbm_to_vmem [thread:$0]  %s1, 2048, %s354, [#allocation6], 64, 64, 4
        $region16: #{tpu_custom_call.1} parent=11 // pred_fallthru
          _
        // Predicated region
        $region17: #{tpu_custom_call.1} parent=11 // pred_check
          %p360 = pneg %p96
        $region18: #{tpu_custom_call.1} parent=11 // pred_check_branch
          %362 = sbr.rel (%p360) target = $region20
        $region19: #{tpu_custom_call.1} parent=11 // pred_region
          _
        $region20: #{tpu_custom_call.1} parent=11 // pred_fallthru
          _
        // Predicated region
        $region21: #{tpu_custom_call.1} parent=11 // pred_check
          %p363 = pneg %p117
        $region22: #{tpu_custom_call.1} parent=11 // pred_check_branch
          %365 = sbr.rel (%p363) target = $region24
        $region23: #{tpu_custom_call.1} parent=11 // pred_region
          %s367 = ssub.s32 2048, 2048
          %368 = vsyncadd [#allocation6], %s367
          %s369 = sshll.u32 [#allocation7], 4
          %s370 = int_to_ptr.vmem [resolvable:$true] %s369
          %375 = dma.hbm_to_vmem [thread:$0]  %s3, 2048, %s370, [#allocation6], 64, 64, 4
        $region24: #{tpu_custom_call.1} parent=11 // pred_fallthru
          _
        // Predicated region
        $region25: #{tpu_custom_call.1} parent=11 // pred_check
          %p376 = pneg %p138
        $region26: #{tpu_custom_call.1} parent=11 // pred_check_branch
          %378 = sbr.rel (%p376) target = $region28
        $region27: #{tpu_custom_call.1} parent=11 // pred_region
          _
        $region28: #{tpu_custom_call.1} parent=11 // pred_fallthru
          _
        // Predicated region
        $region29: #{tpu_custom_call.1} parent=11 // pred_check
          %p379 = pneg %p159
        $region30: #{tpu_custom_call.1} parent=11 // pred_check_branch
          %381 = sbr.rel (%p379) target = $region32
        $region31: #{tpu_custom_call.1} parent=11 // pred_region
          %s383 = ssub.s32 1024, 1024
          %384 = vsyncadd [#allocation9], %s383
          %s385 = sshll.u32 [#allocation8], 4
          %s386 = int_to_ptr.vmem [resolvable:$true] %s385
          %391 = dma.hbm_to_vmem [thread:$0]  %s5, 1024, %s386, [#allocation9], 64, 64, 4
        $region32: #{tpu_custom_call.1} parent=11 // pred_fallthru
          _
        // Predicated region
        $region33: #{tpu_custom_call.1} parent=11 // pred_check
          %p392 = pneg %p180
        $region34: #{tpu_custom_call.1} parent=11 // pred_check_branch
          %394 = sbr.rel (%p392) target = $region36
        $region35: #{tpu_custom_call.1} parent=11 // pred_region
          _
        $region36: #{tpu_custom_call.1} parent=11 // pred_fallthru
          _
        // Predicated region
        $region37: #{tpu_custom_call.1} parent=11 // pred_check
          %p395 = pneg %p201
        $region38: #{tpu_custom_call.1} parent=11 // pred_check_branch
          %397 = sbr.rel (%p395) target = $region40
        $region39: #{tpu_custom_call.1} parent=11 // pred_region
          %s399 = ssub.s32 2048, 2048
          %400 = vsyncadd [#allocation9], %s399
          %s401 = sshll.u32 [#allocation10], 4
          %s402 = int_to_ptr.vmem [resolvable:$true] %s401
          %407 = dma.hbm_to_vmem [thread:$0]  %s7, 2048, %s402, [#allocation9], 64, 64, 4
        $region40: #{tpu_custom_call.1} parent=11 // pred_fallthru
          _
        // Predicated region
        $region41: #{tpu_custom_call.1} parent=11 // pred_check
          %p408 = pneg %p222
        $region42: #{tpu_custom_call.1} parent=11 // pred_check_branch
          %410 = sbr.rel (%p408) target = $region44
        $region43: #{tpu_custom_call.1} parent=11 // pred_region
          _
        $region44: #{tpu_custom_call.1} parent=11 // pred_fallthru
          _
        // Predicated region
        $region45: #{tpu_custom_call.1} parent=11 // pred_check
          %p411 = pneg %p243
        $region46: #{tpu_custom_call.1} parent=11 // pred_check_branch
          %413 = sbr.rel (%p411) target = $region48
        $region47: #{tpu_custom_call.1} parent=11 // pred_region
          %s415 = ssub.s32 2048, 2048
          %416 = vsyncadd [#allocation12], %s415
          %s417 = sshll.u32 [#allocation11], 4
          %s418 = int_to_ptr.vmem [resolvable:$true] %s417
          %423 = dma.hbm_to_vmem [thread:$0]  %s9, 2048, %s418, [#allocation12], 64, 64, 4
        $region48: #{tpu_custom_call.1} parent=11 // pred_fallthru
          _
        // Predicated region
        $region49: #{tpu_custom_call.1} parent=11 // pred_check
          %p424 = pneg %p264
        $region50: #{tpu_custom_call.1} parent=11 // pred_check_branch
          %426 = sbr.rel (%p424) target = $region52
        $region51: #{tpu_custom_call.1} parent=11 // pred_region
          _
        $region52: #{tpu_custom_call.1} parent=11 // pred_fallthru
          _
        // Predicated region
        $region53: #{tpu_custom_call.1} parent=11 // pred_check
          %p427 = pneg %p285
        $region54: #{tpu_custom_call.1} parent=11 // pred_check_branch
          %429 = sbr.rel (%p427) target = $region56
        $region55: #{tpu_custom_call.1} parent=11 // pred_region
          %s431 = ssub.s32 1024, 1024
          %432 = vsyncadd [#allocation12], %s431
          %s433 = sshll.u32 [#allocation13], 4
          %s434 = int_to_ptr.vmem [resolvable:$true] %s433
          %439 = dma.hbm_to_vmem [thread:$0]  %s11, 1024, %s434, [#allocation12], 64, 64, 4
        $region56: #{tpu_custom_call.1} parent=11 // pred_fallthru
          _
        // Predicated region
        $region57: #{tpu_custom_call.1} parent=11 // pred_check
          %p440 = pneg %p306
        $region58: #{tpu_custom_call.1} parent=11 // pred_check_branch
          %442 = sbr.rel (%p440) target = $region60
        $region59: #{tpu_custom_call.1} parent=11 // pred_region
          _
        $region60: #{tpu_custom_call.1} parent=11 // pred_fallthru
          _
      $region12: #{tpu_custom_call.1} parent=5 // pred_fallthru
        _
      %p443 = scmp.lt.s32.totalorder %s28, 2
      // Predicated region
      $region61: #{tpu_custom_call.1} parent=5 // pred_check
        %p444 = pneg %p443
      $region62: #{tpu_custom_call.1} parent=5 // pred_check_branch
        %446 = sbr.rel (%p444) target = $region64
      $region63: #{tpu_custom_call.1} parent=5 // pred_region
        // Predicated region
        $region65: #{tpu_custom_call.1} parent=63 // pred_check
          %p447 = pneg %p48
        $region66: #{tpu_custom_call.1} parent=63 // pred_check_branch
          %449 = sbr.rel (%p447) target = $region68
        $region67: #{tpu_custom_call.1} parent=63 // pred_region
          %s450 = sand.u32 %s38, 1
          %s451 = scalar_lea.sflag [#allocation3], %s450
          %s452 = sand.u32 %s38, 1
          %s453 = smul.addr %s452, 8
          %s454 = scalar_lea.vmem [#allocation2], %s453
          %s456 = ssub.s32 128, 128
          %457 = vsyncadd %s451, %s456
          %s458 = smul.addr %s28, 2
          %s459 = smul.addr %s458, 64
          %s460 = scalar_lea.hbm %s0, %s459
          %s461 = sshll.u32 %s454, 4
          %s462 = int_to_ptr.vmem [resolvable:$true] %s461
          %467 = dma.hbm_to_vmem [thread:$0]  %s460, 128, %s462, %s451, 64, 64, 4
        $region68: #{tpu_custom_call.1} parent=63 // pred_fallthru
          _
      $region64: #{tpu_custom_call.1} parent=5 // pred_fallthru
        _
      %p468 = scmp.le.s32.totalorder 1, %s28
      %p469 = scmp.lt.s32.totalorder %s28, 3
      %p470 = pnand %p468, %p469
      %p471 = pneg %p470
      // Predicated region
      $region69: #{tpu_custom_call.1} parent=5 // pred_check
        _
      $region70: #{tpu_custom_call.1} parent=5 // pred_check_branch
        %473 = sbr.rel (%p470) target = $region72
      $region71: #{tpu_custom_call.1} parent=5 // pred_region
        %s474 = ssub.s32 %s28, 1
        %s475 = sand.u32 %s41, 1
        %s476 = scalar_lea.sflag [#allocation3], %s475
        %s477 = sand.u32 %s41, 1
        %s478 = smul.addr %s477, 8
        %s479 = scalar_lea.vmem [#allocation2], %s478
        // Predicated region
        $region73: #{tpu_custom_call.1} parent=71 // pred_check
          %p480 = pneg %p54
        $region74: #{tpu_custom_call.1} parent=71 // pred_check_branch
          %482 = sbr.rel (%p480) target = $region76
        $region75: #{tpu_custom_call.1} parent=71 // pred_region
          %483 = dma.done %s476, 128
        $region76: #{tpu_custom_call.1} parent=71 // pred_fallthru
          _
        // Predicated region
        $region77: #{tpu_custom_call.1} parent=71 // pred_check
          %p484 = pneg %p75
        $region78: #{tpu_custom_call.1} parent=71 // pred_check_branch
          %486 = sbr.rel (%p484) target = $region80
        $region79: #{tpu_custom_call.1} parent=71 // pred_region
          %487 = dma.done [#allocation6], 2048
        $region80: #{tpu_custom_call.1} parent=71 // pred_fallthru
          _
        // Predicated region
        $region81: #{tpu_custom_call.1} parent=71 // pred_check
          %p488 = pneg %p117
        $region82: #{tpu_custom_call.1} parent=71 // pred_check_branch
          %490 = sbr.rel (%p488) target = $region84
        $region83: #{tpu_custom_call.1} parent=71 // pred_region
          %491 = dma.done [#allocation6], 2048
        $region84: #{tpu_custom_call.1} parent=71 // pred_fallthru
          _
        // Predicated region
        $region85: #{tpu_custom_call.1} parent=71 // pred_check
          %p492 = pneg %p159
        $region86: #{tpu_custom_call.1} parent=71 // pred_check_branch
          %494 = sbr.rel (%p492) target = $region88
        $region87: #{tpu_custom_call.1} parent=71 // pred_region
          %495 = dma.done [#allocation9], 1024
        $region88: #{tpu_custom_call.1} parent=71 // pred_fallthru
          _
        // Predicated region
        $region89: #{tpu_custom_call.1} parent=71 // pred_check
          %p496 = pneg %p201
        $region90: #{tpu_custom_call.1} parent=71 // pred_check_branch
          %498 = sbr.rel (%p496) target = $region92
        $region91: #{tpu_custom_call.1} parent=71 // pred_region
          %499 = dma.done [#allocation9], 2048
        $region92: #{tpu_custom_call.1} parent=71 // pred_fallthru
          _
        // Predicated region
        $region93: #{tpu_custom_call.1} parent=71 // pred_check
          %p500 = pneg %p243
        $region94: #{tpu_custom_call.1} parent=71 // pred_check_branch
          %502 = sbr.rel (%p500) target = $region96
        $region95: #{tpu_custom_call.1} parent=71 // pred_region
          %503 = dma.done [#allocation12], 2048
        $region96: #{tpu_custom_call.1} parent=71 // pred_fallthru
          _
        // Predicated region
        $region97: #{tpu_custom_call.1} parent=71 // pred_check
          %p504 = pneg %p285
        $region98: #{tpu_custom_call.1} parent=71 // pred_check_branch
          %506 = sbr.rel (%p504) target = $region100
        $region99: #{tpu_custom_call.1} parent=71 // pred_region
          %507 = dma.done [#allocation12], 1024
        $region100: #{tpu_custom_call.1} parent=71 // pred_fallthru
          _
        %s508 = sand.u32 %s41, 1
        %s509 = scalar_lea.sflag [#allocation3], %s508
        %s510 = sand.u32 %s41, 1
        %s511 = smul.addr %s510, 8
        %s512 = scalar_lea.vmem [#allocation2], %s511
        %p513 = pneg %p54
        %p514 = pneg %p51
        %p515 = pneg %p75
        %p516 = pneg %p72
        %p517 = pneg %p96
        %p518 = pneg %p93
        %p519 = pneg %p117
        %p520 = pneg %p114
        %p521 = pneg %p138
        %p522 = pneg %p135
        %p523 = pneg %p159
        %p524 = pneg %p156
        %p525 = pneg %p180
        %p526 = pneg %p177
        %p527 = pneg %p201
        %p528 = pneg %p198
        %p529 = pneg %p222
        %p530 = pneg %p219
        %p531 = pneg %p243
        %p532 = pneg %p240
        %p533 = pneg %p264
        %p534 = pneg %p261
        %p535 = pneg %p285
        %p536 = pneg %p282
        %p537 = pneg %p306
        %p538 = pneg %p303
        %p539 = pneg %p332
        %p540 = pneg %p329
        %s541 = sand.u32 %s319, 1
        %s542 = scalar_lea.sflag [#allocation4], %s541
        %s543 = sand.u32 %s319, 1
        %s544 = scalar_lea.vmem [#allocation14], %s543
        %v546 = vld [vmem:[%s479] sm:$0xf]
        %v547 = vld [vmem:[%s479 + $0x4] sm:$0xf]
        %v548 = vunpack.c.l.bf16 %v546
        %v549 = vunpack.c.l.bf16 %v547
        %v550 = vrot.slane %v548, 7
        %v551 = vrot.slane %v549, 7
        %v552 = vlaneseq
        %v553 = vshrl.u32 %v552, 7
        %vm554 = vcmp.lt.s32.totalorder %v553, 1
        %v555 = vsel %vm554, %v550, %v551
        %v556 = vsel %vm554, %v551, %v550
        %v557 = vadd.s32 %v553, 8
        %vm558 = vcmp.ge.s32.totalorder %v553, 1
        %vm559 = vcmp.ge.s32.totalorder %v557, 1
        %v560 = vsel %vm558, %v556, 0.0
        %v561 = vsel %vm559, %v555, 0.0
        %v562 = vpack.c.bf16 %v561, %v560
        %v563 = vld [vmem:[#allocation5] sm:$0xf]
        %v564 = vld [vmem:[#allocation5 + $0x4] sm:$0xf]
        %v565 = vld [vmem:[#allocation5 + $0x8] sm:$0xf]
        %v566 = vld [vmem:[#allocation5 + $0xc] sm:$0xf]
        %v567 = vld [vmem:[#allocation5 + $0x10] sm:$0xf]
        %v568 = vld [vmem:[#allocation5 + $0x14] sm:$0xf]
        %v569 = vld [vmem:[#allocation5 + $0x18] sm:$0xf]
        %v570 = vld [vmem:[#allocation5 + $0x1c] sm:$0xf]
        %v571 = vld [vmem:[#allocation5 + $0x20] sm:$0xf]
        %v572 = vld [vmem:[#allocation5 + $0x24] sm:$0xf]
        %v573 = vld [vmem:[#allocation5 + $0x28] sm:$0xf]
        %v574 = vld [vmem:[#allocation5 + $0x2c] sm:$0xf]
        %v575 = vld [vmem:[#allocation5 + $0x30] sm:$0xf]
        %v576 = vld [vmem:[#allocation5 + $0x34] sm:$0xf]
        %v577 = vld [vmem:[#allocation5 + $0x38] sm:$0xf]
        %v578 = vld [vmem:[#allocation5 + $0x3c] sm:$0xf]
        %s579 = scalar_lea.vmem [#allocation5], 64
        %v580 = vld [vmem:[%s579] sm:$0xf]
        %v581 = vld [vmem:[%s579 + $0x4] sm:$0xf]
        %v582 = vld [vmem:[%s579 + $0x8] sm:$0xf]
        %v583 = vld [vmem:[%s579 + $0xc] sm:$0xf]
        %v584 = vld [vmem:[%s579 + $0x10] sm:$0xf]
        %v585 = vld [vmem:[%s579 + $0x14] sm:$0xf]
        %v586 = vld [vmem:[%s579 + $0x18] sm:$0xf]
        %v587 = vld [vmem:[%s579 + $0x1c] sm:$0xf]
        %v588 = vld [vmem:[%s579 + $0x20] sm:$0xf]
        %v589 = vld [vmem:[%s579 + $0x24] sm:$0xf]
        %v590 = vld [vmem:[%s579 + $0x28] sm:$0xf]
        %v591 = vld [vmem:[%s579 + $0x2c] sm:$0xf]
        %v592 = vld [vmem:[%s579 + $0x30] sm:$0xf]
        %v593 = vld [vmem:[%s579 + $0x34] sm:$0xf]
        %v594 = vld [vmem:[%s579 + $0x38] sm:$0xf]
        %v595 = vld [vmem:[%s579 + $0x3c] sm:$0xf]
        %v598 = vunpack.c.l.b16 %v546
        %v599 = vunpack.c.l.b16 %v547
        %v600 = vpack.c.b16 %v599, %v598
        %v618 = vunpack.c.l.b16 %v580
        %v619 = vunpack.c.l.b16 %v581
        %v620 = vunpack.c.l.b16 %v582
        %v621 = vunpack.c.l.b16 %v583
        %v622 = vunpack.c.l.b16 %v584
        %v623 = vunpack.c.l.b16 %v585
        %v624 = vunpack.c.l.b16 %v586
        %v625 = vunpack.c.l.b16 %v587
        %v626 = vunpack.c.l.b16 %v588
        %v627 = vunpack.c.l.b16 %v589
        %v628 = vunpack.c.l.b16 %v590
        %v629 = vunpack.c.l.b16 %v591
        %v630 = vunpack.c.l.b16 %v592
        %v631 = vunpack.c.l.b16 %v593
        %v632 = vunpack.c.l.b16 %v594
        %v633 = vunpack.c.l.b16 %v595
        %v634 = vpack.c.b16 %v619, %v618
        %v635 = vpack.c.b16 %v621, %v620
        %v636 = vpack.c.b16 %v623, %v622
        %v637 = vpack.c.b16 %v625, %v624
        %v638 = vpack.c.b16 %v627, %v626
        %v639 = vpack.c.b16 %v629, %v628
        %v640 = vpack.c.b16 %v631, %v630
        %v641 = vpack.c.b16 %v633, %v632
        %650 = vmatprep.subr.bf16.mxu0 0
        %651 = vmatpush1.bf16.msra.mxu0 %v634
        %652 = vmatprep.subr.bf16.mxu0 0
        %653 = vmatpush1.bf16.msra.mxu0 %v635
        %654 = vmatprep.subr.bf16.mxu0 0
        %655 = vmatpush1.bf16.msra.mxu0 %v636
        %656 = vmatprep.subr.bf16.mxu0 0
        %657 = vmatpush1.bf16.msra.mxu0 %v637
        %658 = vmatprep.subr.bf16.mxu0 0
        %659 = vmatpush1.bf16.msra.mxu0 %v638
        %660 = vmatprep.subr.bf16.mxu0 0
        %661 = vmatpush1.bf16.msra.mxu0 %v639
        %662 = vmatprep.subr.bf16.mxu0 0
        %663 = vmatpush1.bf16.msra.mxu0 %v640
        %664 = vmatprep.subr.bf16.mxu0 0
        %665 = vmatpush1.bf16.msra.mxu0 %v641
        %666 = vmatprep.subr.bf16.mxu0 0
        %667 = vmatpush1.bf16.msra.mxu0 0
        %668 = vmatprep.subr.bf16.mxu0 0
        %669 = vmatpush1.bf16.msra.mxu0 0
        %670 = vmatprep.subr.bf16.mxu0 0
        %671 = vmatpush1.bf16.msra.mxu0 0
        %672 = vmatprep.subr.bf16.mxu0 0
        %673 = vmatpush1.bf16.msra.mxu0 0
        %674 = vmatprep.subr.bf16.mxu0 0
        %675 = vmatpush1.bf16.msra.mxu0 0
        %676 = vmatprep.subr.bf16.mxu0 0
        %677 = vmatpush1.bf16.msra.mxu0 0
        %678 = vmatprep.subr.bf16.mxu0 0
        %679 = vmatpush1.bf16.msra.mxu0 0
        %680 = vmatprep.subr.bf16.mxu0 0
        %681 = vmatpush1.bf16.msra.mxu0 0
        %682 = vmatprep.mubr.bf16.mxu0 0
        %683 = vmatmul.mubr.bf16.gmra.mrb[0].mxu0 %v600
        %v684 = vpop.f32.mrb[0].mxu0
        %v685 = vadd.f32 0.0, %v684
        %v686 = vpop.f32.mrb[0].mxu0
        %v687 = vpop.f32.mrb[0].mxu0
        %v688 = vadd.f32 0.0, %v687
        %v689 = vpop.f32.mrb[0].mxu0
        %690 = vdwg.mxu0
        %v707 = vunpack.c.l.b16 %v563
        %v708 = vunpack.c.l.b16 %v564
        %v709 = vunpack.c.l.b16 %v565
        %v710 = vunpack.c.l.b16 %v566
        %v711 = vunpack.c.l.b16 %v567
        %v712 = vunpack.c.l.b16 %v568
        %v713 = vunpack.c.l.b16 %v569
        %v714 = vunpack.c.l.b16 %v570
        %v715 = vunpack.c.l.b16 %v571
        %v716 = vunpack.c.l.b16 %v572
        %v717 = vunpack.c.l.b16 %v573
        %v718 = vunpack.c.l.b16 %v574
        %v719 = vunpack.c.l.b16 %v575
        %v720 = vunpack.c.l.b16 %v576
        %v721 = vunpack.c.l.b16 %v577
        %v722 = vunpack.c.l.b16 %v578
        %v723 = vpack.c.b16 %v708, %v707
        %v724 = vpack.c.b16 %v710, %v709
        %v725 = vpack.c.b16 %v712, %v711
        %v726 = vpack.c.b16 %v714, %v713
        %v727 = vpack.c.b16 %v716, %v715
        %v728 = vpack.c.b16 %v718, %v717
        %v729 = vpack.c.b16 %v720, %v719
        %v730 = vpack.c.b16 %v722, %v721
        %739 = vmatprep.subr.bf16.mxu0 0
        %740 = vmatpush1.bf16.msra.mxu0 %v723
        %741 = vmatprep.subr.bf16.mxu0 0
        %742 = vmatpush1.bf16.msra.mxu0 %v724
        %743 = vmatprep.subr.bf16.mxu0 0
        %744 = vmatpush1.bf16.msra.mxu0 %v725
        %745 = vmatprep.subr.bf16.mxu0 0
        %746 = vmatpush1.bf16.msra.mxu0 %v726
        %747 = vmatprep.subr.bf16.mxu0 0
        %748 = vmatpush1.bf16.msra.mxu0 %v727
        %749 = vmatprep.subr.bf16.mxu0 0
        %750 = vmatpush1.bf16.msra.mxu0 %v728
        %751 = vmatprep.subr.bf16.mxu0 0
        %752 = vmatpush1.bf16.msra.mxu0 %v729
        %753 = vmatprep.subr.bf16.mxu0 0
        %754 = vmatpush1.bf16.msra.mxu0 %v730
        %755 = vmatprep.subr.bf16.mxu0 0
        %756 = vmatpush1.bf16.msra.mxu0 0
        %757 = vmatprep.subr.bf16.mxu0 0
        %758 = vmatpush1.bf16.msra.mxu0 0
        %759 = vmatprep.subr.bf16.mxu0 0
        %760 = vmatpush1.bf16.msra.mxu0 0
        %761 = vmatprep.subr.bf16.mxu0 0
        %762 = vmatpush1.bf16.msra.mxu0 0
        %763 = vmatprep.subr.bf16.mxu0 0
        %764 = vmatpush1.bf16.msra.mxu0 0
        %765 = vmatprep.subr.bf16.mxu0 0
        %766 = vmatpush1.bf16.msra.mxu0 0
        %767 = vmatprep.subr.bf16.mxu0 0
        %768 = vmatpush1.bf16.msra.mxu0 0
        %769 = vmatprep.subr.bf16.mxu0 0
        %770 = vmatpush1.bf16.msra.mxu0 0
        %771 = vmatprep.mubr.bf16.mxu0 0
        %772 = vmatmul.mubr.bf16.gmra.mrb[0].mxu0 %v562
        %v773 = vpop.f32.mrb[0].mxu0
        %v774 = vadd.f32 %v685, %v773
        %v775 = vpop.f32.mrb[0].mxu0
        %v776 = vpop.f32.mrb[0].mxu0
        %v777 = vadd.f32 %v688, %v776
        %v778 = vpop.f32.mrb[0].mxu0
        %779 = vdwg.mxu0
        %v780 = vld [vmem:[%s2] sm:$0x1]
        %v782 = vlaneseq
        %v783 = vshrl.u32 %v782, 7
        %v784 = vsub.s32 0, %v783
        %v785 = vrot.slane %v780, %v784
        %v787 = vadd.f32 %v774, %v785
        %v788 = vadd.f32 %v777, %v785
        %v789 = vmax.f32 %v787, 0.0
        %v790 = vmax.f32 %v788, 0.0
        %v791 = vpack.c.bf16 %v790, %v789
        %v792 = vunpack.c.l.bf16 %v791
        %v793 = vunpack.c.h.bf16 %v791
        %v794 = vrot.slane %v792, 7
        %v795 = vrot.slane %v793, 7
        %v796 = vsel %vm554, %v794, %v795
        %v797 = vsel %vm554, %v795, %v794
        %v798 = vsel %vm558, %v797, 0.0
        %v799 = vsel %vm559, %v796, 0.0
        %v800 = vpack.c.bf16 %v799, %v798
        %v801 = vld [vmem:[#allocation7] sm:$0xf]
        %v802 = vld [vmem:[#allocation7 + $0x4] sm:$0xf]
        %v803 = vld [vmem:[#allocation7 + $0x8] sm:$0xf]
        %v804 = vld [vmem:[#allocation7 + $0xc] sm:$0xf]
        %v805 = vld [vmem:[#allocation7 + $0x10] sm:$0xf]
        %v806 = vld [vmem:[#allocation7 + $0x14] sm:$0xf]
        %v807 = vld [vmem:[#allocation7 + $0x18] sm:$0xf]
        %v808 = vld [vmem:[#allocation7 + $0x1c] sm:$0xf]
        %v809 = vld [vmem:[#allocation7 + $0x20] sm:$0xf]
        %v810 = vld [vmem:[#allocation7 + $0x24] sm:$0xf]
        %v811 = vld [vmem:[#allocation7 + $0x28] sm:$0xf]
        %v812 = vld [vmem:[#allocation7 + $0x2c] sm:$0xf]
        %v813 = vld [vmem:[#allocation7 + $0x30] sm:$0xf]
        %v814 = vld [vmem:[#allocation7 + $0x34] sm:$0xf]
        %v815 = vld [vmem:[#allocation7 + $0x38] sm:$0xf]
        %v816 = vld [vmem:[#allocation7 + $0x3c] sm:$0xf]
        %s817 = scalar_lea.vmem [#allocation7], 64
        %v818 = vld [vmem:[%s817] sm:$0xf]
        %v819 = vld [vmem:[%s817 + $0x4] sm:$0xf]
        %v820 = vld [vmem:[%s817 + $0x8] sm:$0xf]
        %v821 = vld [vmem:[%s817 + $0xc] sm:$0xf]
        %v822 = vld [vmem:[%s817 + $0x10] sm:$0xf]
        %v823 = vld [vmem:[%s817 + $0x14] sm:$0xf]
        %v824 = vld [vmem:[%s817 + $0x18] sm:$0xf]
        %v825 = vld [vmem:[%s817 + $0x1c] sm:$0xf]
        %v826 = vld [vmem:[%s817 + $0x20] sm:$0xf]
        %v827 = vld [vmem:[%s817 + $0x24] sm:$0xf]
        %v828 = vld [vmem:[%s817 + $0x28] sm:$0xf]
        %v829 = vld [vmem:[%s817 + $0x2c] sm:$0xf]
        %v830 = vld [vmem:[%s817 + $0x30] sm:$0xf]
        %v831 = vld [vmem:[%s817 + $0x34] sm:$0xf]
        %v832 = vld [vmem:[%s817 + $0x38] sm:$0xf]
        %v833 = vld [vmem:[%s817 + $0x3c] sm:$0xf]
        %v850 = vunpack.c.l.b16 %v818
        %v851 = vunpack.c.l.b16 %v819
        %v852 = vunpack.c.l.b16 %v820
        %v853 = vunpack.c.l.b16 %v821
        %v854 = vunpack.c.l.b16 %v822
        %v855 = vunpack.c.l.b16 %v823
        %v856 = vunpack.c.l.b16 %v824
        %v857 = vunpack.c.l.b16 %v825
        %v858 = vunpack.c.l.b16 %v826
        %v859 = vunpack.c.l.b16 %v827
        %v860 = vunpack.c.l.b16 %v828
        %v861 = vunpack.c.l.b16 %v829
        %v862 = vunpack.c.l.b16 %v830
        %v863 = vunpack.c.l.b16 %v831
        %v864 = vunpack.c.l.b16 %v832
        %v865 = vunpack.c.l.b16 %v833
        %v866 = vpack.c.b16 %v851, %v850
        %v867 = vpack.c.b16 %v853, %v852
        %v868 = vpack.c.b16 %v855, %v854
        %v869 = vpack.c.b16 %v857, %v856
        %v870 = vpack.c.b16 %v859, %v858
        %v871 = vpack.c.b16 %v861, %v860
        %v872 = vpack.c.b16 %v863, %v862
        %v873 = vpack.c.b16 %v865, %v864
        %882 = vmatprep.subr.bf16.mxu0 0
        %883 = vmatpush1.bf16.msra.mxu0 %v866
        %884 = vmatprep.subr.bf16.mxu0 0
        %885 = vmatpush1.bf16.msra.mxu0 %v867
        %886 = vmatprep.subr.bf16.mxu0 0
        %887 = vmatpush1.bf16.msra.mxu0 %v868
        %888 = vmatprep.subr.bf16.mxu0 0
        %889 = vmatpush1.bf16.msra.mxu0 %v869
        %890 = vmatprep.subr.bf16.mxu0 0
        %891 = vmatpush1.bf16.msra.mxu0 %v870
        %892 = vmatprep.subr.bf16.mxu0 0
        %893 = vmatpush1.bf16.msra.mxu0 %v871
        %894 = vmatprep.subr.bf16.mxu0 0
        %895 = vmatpush1.bf16.msra.mxu0 %v872
        %896 = vmatprep.subr.bf16.mxu0 0
        %897 = vmatpush1.bf16.msra.mxu0 %v873
        %898 = vmatprep.subr.bf16.mxu0 0
        %899 = vmatpush1.bf16.msra.mxu0 0
        %900 = vmatprep.subr.bf16.mxu0 0
        %901 = vmatpush1.bf16.msra.mxu0 0
        %902 = vmatprep.subr.bf16.mxu0 0
        %903 = vmatpush1.bf16.msra.mxu0 0
        %904 = vmatprep.subr.bf16.mxu0 0
        %905 = vmatpush1.bf16.msra.mxu0 0
        %906 = vmatprep.subr.bf16.mxu0 0
        %907 = vmatpush1.bf16.msra.mxu0 0
        %908 = vmatprep.subr.bf16.mxu0 0
        %909 = vmatpush1.bf16.msra.mxu0 0
        %910 = vmatprep.subr.bf16.mxu0 0
        %911 = vmatpush1.bf16.msra.mxu0 0
        %912 = vmatprep.subr.bf16.mxu0 0
        %913 = vmatpush1.bf16.msra.mxu0 0
        %914 = vmatprep.mubr.bf16.mxu0 0
        %915 = vmatmul.mubr.bf16.gmra.mrb[0].mxu0 %v791
        %v916 = vpop.f32.mrb[0].mxu0
        %v917 = vadd.f32 0.0, %v916
        %v918 = vpop.f32.mrb[0].mxu0
        %v919 = vpop.f32.mrb[0].mxu0
        %v920 = vadd.f32 0.0, %v919
        %v921 = vpop.f32.mrb[0].mxu0
        %922 = vdwg.mxu0
        %v939 = vunpack.c.l.b16 %v801
        %v940 = vunpack.c.l.b16 %v802
        %v941 = vunpack.c.l.b16 %v803
        %v942 = vunpack.c.l.b16 %v804
        %v943 = vunpack.c.l.b16 %v805
        %v944 = vunpack.c.l.b16 %v806
        %v945 = vunpack.c.l.b16 %v807
        %v946 = vunpack.c.l.b16 %v808
        %v947 = vunpack.c.l.b16 %v809
        %v948 = vunpack.c.l.b16 %v810
        %v949 = vunpack.c.l.b16 %v811
        %v950 = vunpack.c.l.b16 %v812
        %v951 = vunpack.c.l.b16 %v813
        %v952 = vunpack.c.l.b16 %v814
        %v953 = vunpack.c.l.b16 %v815
        %v954 = vunpack.c.l.b16 %v816
        %v955 = vpack.c.b16 %v940, %v939
        %v956 = vpack.c.b16 %v942, %v941
        %v957 = vpack.c.b16 %v944, %v943
        %v958 = vpack.c.b16 %v946, %v945
        %v959 = vpack.c.b16 %v948, %v947
        %v960 = vpack.c.b16 %v950, %v949
        %v961 = vpack.c.b16 %v952, %v951
        %v962 = vpack.c.b16 %v954, %v953
        %971 = vmatprep.subr.bf16.mxu0 0
        %972 = vmatpush1.bf16.msra.mxu0 %v955
        %973 = vmatprep.subr.bf16.mxu0 0
        %974 = vmatpush1.bf16.msra.mxu0 %v956
        %975 = vmatprep.subr.bf16.mxu0 0
        %976 = vmatpush1.bf16.msra.mxu0 %v957
        %977 = vmatprep.subr.bf16.mxu0 0
        %978 = vmatpush1.bf16.msra.mxu0 %v958
        %979 = vmatprep.subr.bf16.mxu0 0
        %980 = vmatpush1.bf16.msra.mxu0 %v959
        %981 = vmatprep.subr.bf16.mxu0 0
        %982 = vmatpush1.bf16.msra.mxu0 %v960
        %983 = vmatprep.subr.bf16.mxu0 0
        %984 = vmatpush1.bf16.msra.mxu0 %v961
        %985 = vmatprep.subr.bf16.mxu0 0
        %986 = vmatpush1.bf16.msra.mxu0 %v962
        %987 = vmatprep.subr.bf16.mxu0 0
        %988 = vmatpush1.bf16.msra.mxu0 0
        %989 = vmatprep.subr.bf16.mxu0 0
        %990 = vmatpush1.bf16.msra.mxu0 0
        %991 = vmatprep.subr.bf16.mxu0 0
        %992 = vmatpush1.bf16.msra.mxu0 0
        %993 = vmatprep.subr.bf16.mxu0 0
        %994 = vmatpush1.bf16.msra.mxu0 0
        %995 = vmatprep.subr.bf16.mxu0 0
        %996 = vmatpush1.bf16.msra.mxu0 0
        %997 = vmatprep.subr.bf16.mxu0 0
        %998 = vmatpush1.bf16.msra.mxu0 0
        %999 = vmatprep.subr.bf16.mxu0 0
        %1000 = vmatpush1.bf16.msra.mxu0 0
        %1001 = vmatprep.subr.bf16.mxu0 0
        %1002 = vmatpush1.bf16.msra.mxu0 0
        %1003 = vmatprep.mubr.bf16.mxu0 0
        %1004 = vmatmul.mubr.bf16.gmra.mrb[0].mxu0 %v800
        %v1005 = vpop.f32.mrb[0].mxu0
        %v1006 = vadd.f32 %v917, %v1005
        %v1007 = vpop.f32.mrb[0].mxu0
        %v1008 = vpop.f32.mrb[0].mxu0
        %v1009 = vadd.f32 %v920, %v1008
        %v1010 = vpop.f32.mrb[0].mxu0
        %1011 = vdwg.mxu0
        %v1012 = vld [vmem:[%s4] sm:$0x1]
        %v1014 = vlaneseq
        %v1015 = vshrl.u32 %v1014, 7
        %v1016 = vsub.s32 0, %v1015
        %v1017 = vrot.slane %v1012, %v1016
        %v1019 = vadd.f32 %v1006, %v1017
        %v1020 = vadd.f32 %v1009, %v1017
        %v1021 = vmax.f32 %v1019, 0.0
        %v1022 = vmax.f32 %v1020, 0.0
        %v1023 = vld [vmem:[#allocation8] sm:$0xf]
        %v1024 = vld [vmem:[#allocation8 + $0x4] sm:$0xf]
        %v1025 = vld [vmem:[#allocation8 + $0x8] sm:$0xf]
        %v1026 = vld [vmem:[#allocation8 + $0xc] sm:$0xf]
        %v1027 = vld [vmem:[#allocation8 + $0x10] sm:$0xf]
        %v1028 = vld [vmem:[#allocation8 + $0x14] sm:$0xf]
        %v1029 = vld [vmem:[#allocation8 + $0x18] sm:$0xf]
        %v1030 = vld [vmem:[#allocation8 + $0x1c] sm:$0xf]
        %v1031 = vld [vmem:[#allocation8 + $0x20] sm:$0xf]
        %v1032 = vld [vmem:[#allocation8 + $0x24] sm:$0xf]
        %v1033 = vld [vmem:[#allocation8 + $0x28] sm:$0xf]
        %v1034 = vld [vmem:[#allocation8 + $0x2c] sm:$0xf]
        %v1035 = vld [vmem:[#allocation8 + $0x30] sm:$0xf]
        %v1036 = vld [vmem:[#allocation8 + $0x34] sm:$0xf]
        %v1037 = vld [vmem:[#allocation8 + $0x38] sm:$0xf]
        %v1038 = vld [vmem:[#allocation8 + $0x3c] sm:$0xf]
        %v1039 = vld [vmem:[%s6] sm:$0x1]
        %v1041 = vlaneseq
        %v1042 = vshrl.u32 %v1041, 7
        %v1043 = vsub.s32 0, %v1042
        %v1044 = vrot.slane %v1039, %v1043
        %v1062 = vunpack.c.l.b16 %v1023
        %v1063 = vunpack.c.l.b16 %v1024
        %v1064 = vunpack.c.l.b16 %v1025
        %v1065 = vunpack.c.l.b16 %v1026
        %v1066 = vunpack.c.l.b16 %v1027
        %v1067 = vunpack.c.l.b16 %v1028
        %v1068 = vunpack.c.l.b16 %v1029
        %v1069 = vunpack.c.l.b16 %v1030
        %v1070 = vunpack.c.l.b16 %v1031
        %v1071 = vunpack.c.l.b16 %v1032
        %v1072 = vunpack.c.l.b16 %v1033
        %v1073 = vunpack.c.l.b16 %v1034
        %v1074 = vunpack.c.l.b16 %v1035
        %v1075 = vunpack.c.l.b16 %v1036
        %v1076 = vunpack.c.l.b16 %v1037
        %v1077 = vunpack.c.l.b16 %v1038
        %v1078 = vpack.c.b16 %v1063, %v1062
        %v1079 = vpack.c.b16 %v1065, %v1064
        %v1080 = vpack.c.b16 %v1067, %v1066
        %v1081 = vpack.c.b16 %v1069, %v1068
        %v1082 = vpack.c.b16 %v1071, %v1070
        %v1083 = vpack.c.b16 %v1073, %v1072
        %v1084 = vpack.c.b16 %v1075, %v1074
        %v1085 = vpack.c.b16 %v1077, %v1076
        %1094 = vmatprep.subr.bf16.mxu0 0
        %1095 = vmatpush1.bf16.msra.mxu0 %v1078
        %1096 = vmatprep.subr.bf16.mxu0 0
        %1097 = vmatpush1.bf16.msra.mxu0 %v1079
        %1098 = vmatprep.subr.bf16.mxu0 0
        %1099 = vmatpush1.bf16.msra.mxu0 %v1080
        %1100 = vmatprep.subr.bf16.mxu0 0
        %1101 = vmatpush1.bf16.msra.mxu0 %v1081
        %1102 = vmatprep.subr.bf16.mxu0 0
        %1103 = vmatpush1.bf16.msra.mxu0 %v1082
        %1104 = vmatprep.subr.bf16.mxu0 0
        %1105 = vmatpush1.bf16.msra.mxu0 %v1083
        %1106 = vmatprep.subr.bf16.mxu0 0
        %1107 = vmatpush1.bf16.msra.mxu0 %v1084
        %1108 = vmatprep.subr.bf16.mxu0 0
        %1109 = vmatpush1.bf16.msra.mxu0 %v1085
        %1110 = vmatprep.subr.bf16.mxu0 0
        %1111 = vmatpush1.bf16.msra.mxu0 0
        %1112 = vmatprep.subr.bf16.mxu0 0
        %1113 = vmatpush1.bf16.msra.mxu0 0
        %1114 = vmatprep.subr.bf16.mxu0 0
        %1115 = vmatpush1.bf16.msra.mxu0 0
        %1116 = vmatprep.subr.bf16.mxu0 0
        %1117 = vmatpush1.bf16.msra.mxu0 0
        %1118 = vmatprep.subr.bf16.mxu0 0
        %1119 = vmatpush1.bf16.msra.mxu0 0
        %1120 = vmatprep.subr.bf16.mxu0 0
        %1121 = vmatpush1.bf16.msra.mxu0 0
        %1122 = vmatprep.subr.bf16.mxu0 0
        %1123 = vmatpush1.bf16.msra.mxu0 0
        %1124 = vmatprep.subr.bf16.mxu0 0
        %1125 = vmatpush1.bf16.msra.mxu0 0
        %1126 = vmatprep.mubr.bf16.mxu0 0
        %1127 = vmatmul.mubr.bf16.gmra.mrb[0].mxu0 %v600
        %v1128 = vpop.f32.mrb[0].mxu0
        %v1129 = vadd.f32 %v1044, %v1128
        %v1130 = vpop.f32.mrb[0].mxu0
        %v1131 = vpop.f32.mrb[0].mxu0
        %v1132 = vadd.f32 %v1044, %v1131
        %v1133 = vpop.f32.mrb[0].mxu0
        %1134 = vdwg.mxu0
        %v1135 = vadd.f32 %v1021, %v1129
        %v1136 = vadd.f32 %v1022, %v1132
        %v1137 = vmax.f32 %v1135, 0.0
        %v1138 = vmax.f32 %v1136, 0.0
        %v1139 = vpack.c.bf16 %v1138, %v1137
        %v1140 = vunpack.c.l.bf16 %v1139
        %v1141 = vunpack.c.h.bf16 %v1139
        %v1142 = vrot.slane %v1140, 6
        %v1143 = vrot.slane %v1141, 6
        %vm1144 = vcmp.lt.s32.totalorder %v553, 2
        %v1145 = vsel %vm1144, %v1142, %v1143
        %v1146 = vsel %vm1144, %v1143, %v1142
        %vm1147 = vcmp.ge.s32.totalorder %v553, 2
        %vm1148 = vcmp.ge.s32.totalorder %v557, 2
        %v1149 = vsel %vm1147, %v1146, 0.0
        %v1150 = vsel %vm1148, %v1145, 0.0
        %v1151 = vpack.c.bf16 %v1150, %v1149
        %v1152 = vld [vmem:[#allocation10] sm:$0xf]
        %v1153 = vld [vmem:[#allocation10 + $0x4] sm:$0xf]
        %v1154 = vld [vmem:[#allocation10 + $0x8] sm:$0xf]
        %v1155 = vld [vmem:[#allocation10 + $0xc] sm:$0xf]
        %v1156 = vld [vmem:[#allocation10 + $0x10] sm:$0xf]
        %v1157 = vld [vmem:[#allocation10 + $0x14] sm:$0xf]
        %v1158 = vld [vmem:[#allocation10 + $0x18] sm:$0xf]
        %v1159 = vld [vmem:[#allocation10 + $0x1c] sm:$0xf]
        %v1160 = vld [vmem:[#allocation10 + $0x20] sm:$0xf]
        %v1161 = vld [vmem:[#allocation10 + $0x24] sm:$0xf]
        %v1162 = vld [vmem:[#allocation10 + $0x28] sm:$0xf]
        %v1163 = vld [vmem:[#allocation10 + $0x2c] sm:$0xf]
        %v1164 = vld [vmem:[#allocation10 + $0x30] sm:$0xf]
        %v1165 = vld [vmem:[#allocation10 + $0x34] sm:$0xf]
        %v1166 = vld [vmem:[#allocation10 + $0x38] sm:$0xf]
        %v1167 = vld [vmem:[#allocation10 + $0x3c] sm:$0xf]
        %s1168 = scalar_lea.vmem [#allocation10], 64
        %v1169 = vld [vmem:[%s1168] sm:$0xf]
        %v1170 = vld [vmem:[%s1168 + $0x4] sm:$0xf]
        %v1171 = vld [vmem:[%s1168 + $0x8] sm:$0xf]
        %v1172 = vld [vmem:[%s1168 + $0xc] sm:$0xf]
        %v1173 = vld [vmem:[%s1168 + $0x10] sm:$0xf]
        %v1174 = vld [vmem:[%s1168 + $0x14] sm:$0xf]
        %v1175 = vld [vmem:[%s1168 + $0x18] sm:$0xf]
        %v1176 = vld [vmem:[%s1168 + $0x1c] sm:$0xf]
        %v1177 = vld [vmem:[%s1168 + $0x20] sm:$0xf]
        %v1178 = vld [vmem:[%s1168 + $0x24] sm:$0xf]
        %v1179 = vld [vmem:[%s1168 + $0x28] sm:$0xf]
        %v1180 = vld [vmem:[%s1168 + $0x2c] sm:$0xf]
        %v1181 = vld [vmem:[%s1168 + $0x30] sm:$0xf]
        %v1182 = vld [vmem:[%s1168 + $0x34] sm:$0xf]
        %v1183 = vld [vmem:[%s1168 + $0x38] sm:$0xf]
        %v1184 = vld [vmem:[%s1168 + $0x3c] sm:$0xf]
        %v1201 = vunpack.c.l.b16 %v1169
        %v1202 = vunpack.c.l.b16 %v1170
        %v1203 = vunpack.c.l.b16 %v1171
        %v1204 = vunpack.c.l.b16 %v1172
        %v1205 = vunpack.c.l.b16 %v1173
        %v1206 = vunpack.c.l.b16 %v1174
        %v1207 = vunpack.c.l.b16 %v1175
        %v1208 = vunpack.c.l.b16 %v1176
        %v1209 = vunpack.c.l.b16 %v1177
        %v1210 = vunpack.c.l.b16 %v1178
        %v1211 = vunpack.c.l.b16 %v1179
        %v1212 = vunpack.c.l.b16 %v1180
        %v1213 = vunpack.c.l.b16 %v1181
        %v1214 = vunpack.c.l.b16 %v1182
        %v1215 = vunpack.c.l.b16 %v1183
        %v1216 = vunpack.c.l.b16 %v1184
        %v1217 = vpack.c.b16 %v1202, %v1201
        %v1218 = vpack.c.b16 %v1204, %v1203
        %v1219 = vpack.c.b16 %v1206, %v1205
        %v1220 = vpack.c.b16 %v1208, %v1207
        %v1221 = vpack.c.b16 %v1210, %v1209
        %v1222 = vpack.c.b16 %v1212, %v1211
        %v1223 = vpack.c.b16 %v1214, %v1213
        %v1224 = vpack.c.b16 %v1216, %v1215
        %1233 = vmatprep.subr.bf16.mxu0 0
        %1234 = vmatpush1.bf16.msra.mxu0 %v1217
        %1235 = vmatprep.subr.bf16.mxu0 0
        %1236 = vmatpush1.bf16.msra.mxu0 %v1218
        %1237 = vmatprep.subr.bf16.mxu0 0
        %1238 = vmatpush1.bf16.msra.mxu0 %v1219
        %1239 = vmatprep.subr.bf16.mxu0 0
        %1240 = vmatpush1.bf16.msra.mxu0 %v1220
        %1241 = vmatprep.subr.bf16.mxu0 0
        %1242 = vmatpush1.bf16.msra.mxu0 %v1221
        %1243 = vmatprep.subr.bf16.mxu0 0
        %1244 = vmatpush1.bf16.msra.mxu0 %v1222
        %1245 = vmatprep.subr.bf16.mxu0 0
        %1246 = vmatpush1.bf16.msra.mxu0 %v1223
        %1247 = vmatprep.subr.bf16.mxu0 0
        %1248 = vmatpush1.bf16.msra.mxu0 %v1224
        %1249 = vmatprep.subr.bf16.mxu0 0
        %1250 = vmatpush1.bf16.msra.mxu0 0
        %1251 = vmatprep.subr.bf16.mxu0 0
        %1252 = vmatpush1.bf16.msra.mxu0 0
        %1253 = vmatprep.subr.bf16.mxu0 0
        %1254 = vmatpush1.bf16.msra.mxu0 0
        %1255 = vmatprep.subr.bf16.mxu0 0
        %1256 = vmatpush1.bf16.msra.mxu0 0
        %1257 = vmatprep.subr.bf16.mxu0 0
        %1258 = vmatpush1.bf16.msra.mxu0 0
        %1259 = vmatprep.subr.bf16.mxu0 0
        %1260 = vmatpush1.bf16.msra.mxu0 0
        %1261 = vmatprep.subr.bf16.mxu0 0
        %1262 = vmatpush1.bf16.msra.mxu0 0
        %1263 = vmatprep.subr.bf16.mxu0 0
        %1264 = vmatpush1.bf16.msra.mxu0 0
        %1265 = vmatprep.mubr.bf16.mxu0 0
        %1266 = vmatmul.mubr.bf16.gmra.mrb[0].mxu0 %v1139
        %v1267 = vpop.f32.mrb[0].mxu0
        %v1268 = vadd.f32 0.0, %v1267
        %v1269 = vpop.f32.mrb[0].mxu0
        %v1270 = vpop.f32.mrb[0].mxu0
        %v1271 = vadd.f32 0.0, %v1270
        %v1272 = vpop.f32.mrb[0].mxu0
        %1273 = vdwg.mxu0
        %v1290 = vunpack.c.l.b16 %v1152
        %v1291 = vunpack.c.l.b16 %v1153
        %v1292 = vunpack.c.l.b16 %v1154
        %v1293 = vunpack.c.l.b16 %v1155
        %v1294 = vunpack.c.l.b16 %v1156
        %v1295 = vunpack.c.l.b16 %v1157
        %v1296 = vunpack.c.l.b16 %v1158
        %v1297 = vunpack.c.l.b16 %v1159
        %v1298 = vunpack.c.l.b16 %v1160
        %v1299 = vunpack.c.l.b16 %v1161
        %v1300 = vunpack.c.l.b16 %v1162
        %v1301 = vunpack.c.l.b16 %v1163
        %v1302 = vunpack.c.l.b16 %v1164
        %v1303 = vunpack.c.l.b16 %v1165
        %v1304 = vunpack.c.l.b16 %v1166
        %v1305 = vunpack.c.l.b16 %v1167
        %v1306 = vpack.c.b16 %v1291, %v1290
        %v1307 = vpack.c.b16 %v1293, %v1292
        %v1308 = vpack.c.b16 %v1295, %v1294
        %v1309 = vpack.c.b16 %v1297, %v1296
        %v1310 = vpack.c.b16 %v1299, %v1298
        %v1311 = vpack.c.b16 %v1301, %v1300
        %v1312 = vpack.c.b16 %v1303, %v1302
        %v1313 = vpack.c.b16 %v1305, %v1304
        %1322 = vmatprep.subr.bf16.mxu0 0
        %1323 = vmatpush1.bf16.msra.mxu0 %v1306
        %1324 = vmatprep.subr.bf16.mxu0 0
        %1325 = vmatpush1.bf16.msra.mxu0 %v1307
        %1326 = vmatprep.subr.bf16.mxu0 0
        %1327 = vmatpush1.bf16.msra.mxu0 %v1308
        %1328 = vmatprep.subr.bf16.mxu0 0
        %1329 = vmatpush1.bf16.msra.mxu0 %v1309
        %1330 = vmatprep.subr.bf16.mxu0 0
        %1331 = vmatpush1.bf16.msra.mxu0 %v1310
        %1332 = vmatprep.subr.bf16.mxu0 0
        %1333 = vmatpush1.bf16.msra.mxu0 %v1311
        %1334 = vmatprep.subr.bf16.mxu0 0
        %1335 = vmatpush1.bf16.msra.mxu0 %v1312
        %1336 = vmatprep.subr.bf16.mxu0 0
        %1337 = vmatpush1.bf16.msra.mxu0 %v1313
        %1338 = vmatprep.subr.bf16.mxu0 0
        %1339 = vmatpush1.bf16.msra.mxu0 0
        %1340 = vmatprep.subr.bf16.mxu0 0
        %1341 = vmatpush1.bf16.msra.mxu0 0
        %1342 = vmatprep.subr.bf16.mxu0 0
        %1343 = vmatpush1.bf16.msra.mxu0 0
        %1344 = vmatprep.subr.bf16.mxu0 0
        %1345 = vmatpush1.bf16.msra.mxu0 0
        %1346 = vmatprep.subr.bf16.mxu0 0
        %1347 = vmatpush1.bf16.msra.mxu0 0
        %1348 = vmatprep.subr.bf16.mxu0 0
        %1349 = vmatpush1.bf16.msra.mxu0 0
        %1350 = vmatprep.subr.bf16.mxu0 0
        %1351 = vmatpush1.bf16.msra.mxu0 0
        %1352 = vmatprep.subr.bf16.mxu0 0
        %1353 = vmatpush1.bf16.msra.mxu0 0
        %1354 = vmatprep.mubr.bf16.mxu0 0
        %1355 = vmatmul.mubr.bf16.gmra.mrb[0].mxu0 %v1151
        %v1356 = vpop.f32.mrb[0].mxu0
        %v1357 = vadd.f32 %v1268, %v1356
        %v1358 = vpop.f32.mrb[0].mxu0
        %v1359 = vpop.f32.mrb[0].mxu0
        %v1360 = vadd.f32 %v1271, %v1359
        %v1361 = vpop.f32.mrb[0].mxu0
        %1362 = vdwg.mxu0
        %v1363 = vld [vmem:[%s8] sm:$0x1]
        %v1365 = vlaneseq
        %v1366 = vshrl.u32 %v1365, 7
        %v1367 = vsub.s32 0, %v1366
        %v1368 = vrot.slane %v1363, %v1367
        %v1370 = vadd.f32 %v1357, %v1368
        %v1371 = vadd.f32 %v1360, %v1368
        %v1372 = vmax.f32 %v1370, 0.0
        %v1373 = vmax.f32 %v1371, 0.0
        %v1374 = vpack.c.bf16 %v1373, %v1372
        %v1375 = vunpack.c.l.bf16 %v1374
        %v1376 = vunpack.c.h.bf16 %v1374
        %v1377 = vrot.slane %v1375, 6
        %v1378 = vrot.slane %v1376, 6
        %v1379 = vsel %vm1144, %v1377, %v1378
        %v1380 = vsel %vm1144, %v1378, %v1377
        %v1381 = vsel %vm1147, %v1380, 0.0
        %v1382 = vsel %vm1148, %v1379, 0.0
        %v1383 = vpack.c.bf16 %v1382, %v1381
        %v1384 = vld [vmem:[#allocation11] sm:$0xf]
        %v1385 = vld [vmem:[#allocation11 + $0x4] sm:$0xf]
        %v1386 = vld [vmem:[#allocation11 + $0x8] sm:$0xf]
        %v1387 = vld [vmem:[#allocation11 + $0xc] sm:$0xf]
        %v1388 = vld [vmem:[#allocation11 + $0x10] sm:$0xf]
        %v1389 = vld [vmem:[#allocation11 + $0x14] sm:$0xf]
        %v1390 = vld [vmem:[#allocation11 + $0x18] sm:$0xf]
        %v1391 = vld [vmem:[#allocation11 + $0x1c] sm:$0xf]
        %v1392 = vld [vmem:[#allocation11 + $0x20] sm:$0xf]
        %v1393 = vld [vmem:[#allocation11 + $0x24] sm:$0xf]
        %v1394 = vld [vmem:[#allocation11 + $0x28] sm:$0xf]
        %v1395 = vld [vmem:[#allocation11 + $0x2c] sm:$0xf]
        %v1396 = vld [vmem:[#allocation11 + $0x30] sm:$0xf]
        %v1397 = vld [vmem:[#allocation11 + $0x34] sm:$0xf]
        %v1398 = vld [vmem:[#allocation11 + $0x38] sm:$0xf]
        %v1399 = vld [vmem:[#allocation11 + $0x3c] sm:$0xf]
        %s1400 = scalar_lea.vmem [#allocation11], 64
        %v1401 = vld [vmem:[%s1400] sm:$0xf]
        %v1402 = vld [vmem:[%s1400 + $0x4] sm:$0xf]
        %v1403 = vld [vmem:[%s1400 + $0x8] sm:$0xf]
        %v1404 = vld [vmem:[%s1400 + $0xc] sm:$0xf]
        %v1405 = vld [vmem:[%s1400 + $0x10] sm:$0xf]
        %v1406 = vld [vmem:[%s1400 + $0x14] sm:$0xf]
        %v1407 = vld [vmem:[%s1400 + $0x18] sm:$0xf]
        %v1408 = vld [vmem:[%s1400 + $0x1c] sm:$0xf]
        %v1409 = vld [vmem:[%s1400 + $0x20] sm:$0xf]
        %v1410 = vld [vmem:[%s1400 + $0x24] sm:$0xf]
        %v1411 = vld [vmem:[%s1400 + $0x28] sm:$0xf]
        %v1412 = vld [vmem:[%s1400 + $0x2c] sm:$0xf]
        %v1413 = vld [vmem:[%s1400 + $0x30] sm:$0xf]
        %v1414 = vld [vmem:[%s1400 + $0x34] sm:$0xf]
        %v1415 = vld [vmem:[%s1400 + $0x38] sm:$0xf]
        %v1416 = vld [vmem:[%s1400 + $0x3c] sm:$0xf]
        %v1433 = vunpack.c.l.b16 %v1401
        %v1434 = vunpack.c.l.b16 %v1402
        %v1435 = vunpack.c.l.b16 %v1403
        %v1436 = vunpack.c.l.b16 %v1404
        %v1437 = vunpack.c.l.b16 %v1405
        %v1438 = vunpack.c.l.b16 %v1406
        %v1439 = vunpack.c.l.b16 %v1407
        %v1440 = vunpack.c.l.b16 %v1408
        %v1441 = vunpack.c.l.b16 %v1409
        %v1442 = vunpack.c.l.b16 %v1410
        %v1443 = vunpack.c.l.b16 %v1411
        %v1444 = vunpack.c.l.b16 %v1412
        %v1445 = vunpack.c.l.b16 %v1413
        %v1446 = vunpack.c.l.b16 %v1414
        %v1447 = vunpack.c.l.b16 %v1415
        %v1448 = vunpack.c.l.b16 %v1416
        %v1449 = vpack.c.b16 %v1434, %v1433
        %v1450 = vpack.c.b16 %v1436, %v1435
        %v1451 = vpack.c.b16 %v1438, %v1437
        %v1452 = vpack.c.b16 %v1440, %v1439
        %v1453 = vpack.c.b16 %v1442, %v1441
        %v1454 = vpack.c.b16 %v1444, %v1443
        %v1455 = vpack.c.b16 %v1446, %v1445
        %v1456 = vpack.c.b16 %v1448, %v1447
        %1465 = vmatprep.subr.bf16.mxu0 0
        %1466 = vmatpush1.bf16.msra.mxu0 %v1449
        %1467 = vmatprep.subr.bf16.mxu0 0
        %1468 = vmatpush1.bf16.msra.mxu0 %v1450
        %1469 = vmatprep.subr.bf16.mxu0 0
        %1470 = vmatpush1.bf16.msra.mxu0 %v1451
        %1471 = vmatprep.subr.bf16.mxu0 0
        %1472 = vmatpush1.bf16.msra.mxu0 %v1452
        %1473 = vmatprep.subr.bf16.mxu0 0
        %1474 = vmatpush1.bf16.msra.mxu0 %v1453
        %1475 = vmatprep.subr.bf16.mxu0 0
        %1476 = vmatpush1.bf16.msra.mxu0 %v1454
        %1477 = vmatprep.subr.bf16.mxu0 0
        %1478 = vmatpush1.bf16.msra.mxu0 %v1455
        %1479 = vmatprep.subr.bf16.mxu0 0
        %1480 = vmatpush1.bf16.msra.mxu0 %v1456
        %1481 = vmatprep.subr.bf16.mxu0 0
        %1482 = vmatpush1.bf16.msra.mxu0 0
        %1483 = vmatprep.subr.bf16.mxu0 0
        %1484 = vmatpush1.bf16.msra.mxu0 0
        %1485 = vmatprep.subr.bf16.mxu0 0
        %1486 = vmatpush1.bf16.msra.mxu0 0
        %1487 = vmatprep.subr.bf16.mxu0 0
        %1488 = vmatpush1.bf16.msra.mxu0 0
        %1489 = vmatprep.subr.bf16.mxu0 0
        %1490 = vmatpush1.bf16.msra.mxu0 0
        %1491 = vmatprep.subr.bf16.mxu0 0
        %1492 = vmatpush1.bf16.msra.mxu0 0
        %1493 = vmatprep.subr.bf16.mxu0 0
        %1494 = vmatpush1.bf16.msra.mxu0 0
        %1495 = vmatprep.subr.bf16.mxu0 0
        %1496 = vmatpush1.bf16.msra.mxu0 0
        %1497 = vmatprep.mubr.bf16.mxu0 0
        %1498 = vmatmul.mubr.bf16.gmra.mrb[0].mxu0 %v1374
        %v1499 = vpop.f32.mrb[0].mxu0
        %v1500 = vadd.f32 0.0, %v1499
        %v1501 = vpop.f32.mrb[0].mxu0
        %v1502 = vpop.f32.mrb[0].mxu0
        %v1503 = vadd.f32 0.0, %v1502
        %v1504 = vpop.f32.mrb[0].mxu0
        %1505 = vdwg.mxu0
        %v1522 = vunpack.c.l.b16 %v1384
        %v1523 = vunpack.c.l.b16 %v1385
        %v1524 = vunpack.c.l.b16 %v1386
        %v1525 = vunpack.c.l.b16 %v1387
        %v1526 = vunpack.c.l.b16 %v1388
        %v1527 = vunpack.c.l.b16 %v1389
        %v1528 = vunpack.c.l.b16 %v1390
        %v1529 = vunpack.c.l.b16 %v1391
        %v1530 = vunpack.c.l.b16 %v1392
        %v1531 = vunpack.c.l.b16 %v1393
        %v1532 = vunpack.c.l.b16 %v1394
        %v1533 = vunpack.c.l.b16 %v1395
        %v1534 = vunpack.c.l.b16 %v1396
        %v1535 = vunpack.c.l.b16 %v1397
        %v1536 = vunpack.c.l.b16 %v1398
        %v1537 = vunpack.c.l.b16 %v1399
        %v1538 = vpack.c.b16 %v1523, %v1522
        %v1539 = vpack.c.b16 %v1525, %v1524
        %v1540 = vpack.c.b16 %v1527, %v1526
        %v1541 = vpack.c.b16 %v1529, %v1528
        %v1542 = vpack.c.b16 %v1531, %v1530
        %v1543 = vpack.c.b16 %v1533, %v1532
        %v1544 = vpack.c.b16 %v1535, %v1534
        %v1545 = vpack.c.b16 %v1537, %v1536
        %1554 = vmatprep.subr.bf16.mxu0 0
        %1555 = vmatpush1.bf16.msra.mxu0 %v1538
        %1556 = vmatprep.subr.bf16.mxu0 0
        %1557 = vmatpush1.bf16.msra.mxu0 %v1539
        %1558 = vmatprep.subr.bf16.mxu0 0
        %1559 = vmatpush1.bf16.msra.mxu0 %v1540
        %1560 = vmatprep.subr.bf16.mxu0 0
        %1561 = vmatpush1.bf16.msra.mxu0 %v1541
        %1562 = vmatprep.subr.bf16.mxu0 0
        %1563 = vmatpush1.bf16.msra.mxu0 %v1542
        %1564 = vmatprep.subr.bf16.mxu0 0
        %1565 = vmatpush1.bf16.msra.mxu0 %v1543
        %1566 = vmatprep.subr.bf16.mxu0 0
        %1567 = vmatpush1.bf16.msra.mxu0 %v1544
        %1568 = vmatprep.subr.bf16.mxu0 0
        %1569 = vmatpush1.bf16.msra.mxu0 %v1545
        %1570 = vmatprep.subr.bf16.mxu0 0
        %1571 = vmatpush1.bf16.msra.mxu0 0
        %1572 = vmatprep.subr.bf16.mxu0 0
        %1573 = vmatpush1.bf16.msra.mxu0 0
        %1574 = vmatprep.subr.bf16.mxu0 0
        %1575 = vmatpush1.bf16.msra.mxu0 0
        %1576 = vmatprep.subr.bf16.mxu0 0
        %1577 = vmatpush1.bf16.msra.mxu0 0
        %1578 = vmatprep.subr.bf16.mxu0 0
        %1579 = vmatpush1.bf16.msra.mxu0 0
        %1580 = vmatprep.subr.bf16.mxu0 0
        %1581 = vmatpush1.bf16.msra.mxu0 0
        %1582 = vmatprep.subr.bf16.mxu0 0
        %1583 = vmatpush1.bf16.msra.mxu0 0
        %1584 = vmatprep.subr.bf16.mxu0 0
        %1585 = vmatpush1.bf16.msra.mxu0 0
        %1586 = vmatprep.mubr.bf16.mxu0 0
        %1587 = vmatmul.mubr.bf16.gmra.mrb[0].mxu0 %v1383
        %v1588 = vpop.f32.mrb[0].mxu0
        %v1589 = vadd.f32 %v1500, %v1588
        %v1590 = vpop.f32.mrb[0].mxu0
        %v1591 = vpop.f32.mrb[0].mxu0
        %v1592 = vadd.f32 %v1503, %v1591
        %v1593 = vpop.f32.mrb[0].mxu0
        %1594 = vdwg.mxu0
        %v1595 = vld [vmem:[%s10] sm:$0x1]
        %v1597 = vlaneseq
        %v1598 = vshrl.u32 %v1597, 7
        %v1599 = vsub.s32 0, %v1598
        %v1600 = vrot.slane %v1595, %v1599
        %v1602 = vadd.f32 %v1589, %v1600
        %v1603 = vadd.f32 %v1592, %v1600
        %v1604 = vmax.f32 %v1602, 0.0
        %v1605 = vmax.f32 %v1603, 0.0
        %v1606 = vadd.f32 %v1604, %v1140
        %v1607 = vadd.f32 %v1605, %v1141
        %v1608 = vmax.f32 %v1606, 0.0
        %v1609 = vmax.f32 %v1607, 0.0
        %v1610 = vpack.c.bf16 %v1609, %v1608
        %v1611 = vunpack.c.l.bf16 %v1610
        %v1612 = vunpack.c.h.bf16 %v1610
        %v1613 = vadd.f32 %v1611, %v1612
        %v1614 = vrot.slane %v1613, 4
        %v1615 = vadd.f32 %v1613, %v1614
        %v1616 = vrot.slane %v1615, 2
        %v1617 = vadd.f32 %v1615, %v1616
        %v1618 = vrot.slane %v1617, 1
        %v1619 = vadd.f32 %v1617, %v1618
        %v1620 = vrcp.pop 16.0
        %v1621 = vmul.f32 %v1619, %v1620
        %v1622 = vpack.c.bf16 %v1621, %v1621
        %v1623 = vld [vmem:[#allocation13] sm:$0xf]
        %v1624 = vld [vmem:[#allocation13 + $0x4] sm:$0xf]
        %v1625 = vld [vmem:[#allocation13 + $0x8] sm:$0xf]
        %v1626 = vld [vmem:[#allocation13 + $0xc] sm:$0xf]
        %v1627 = vld [vmem:[#allocation13 + $0x10] sm:$0xf]
        %v1628 = vld [vmem:[#allocation13 + $0x14] sm:$0xf]
        %v1629 = vld [vmem:[#allocation13 + $0x18] sm:$0xf]
        %v1630 = vld [vmem:[#allocation13 + $0x1c] sm:$0xf]
        %v1631 = vld [vmem:[#allocation13 + $0x20] sm:$0xf]
        %v1632 = vld [vmem:[#allocation13 + $0x24] sm:$0xf]
        %v1633 = vld [vmem:[#allocation13 + $0x28] sm:$0xf]
        %v1634 = vld [vmem:[#allocation13 + $0x2c] sm:$0xf]
        %v1635 = vld [vmem:[#allocation13 + $0x30] sm:$0xf]
        %v1636 = vld [vmem:[#allocation13 + $0x34] sm:$0xf]
        %v1637 = vld [vmem:[#allocation13 + $0x38] sm:$0xf]
        %v1638 = vld [vmem:[#allocation13 + $0x3c] sm:$0xf]
        %v1639 = vld [vmem:[%s12] sm:$0x1]
        %v1656 = vunpack.c.l.b16 %v1623
        %v1657 = vunpack.c.l.b16 %v1624
        %v1658 = vunpack.c.l.b16 %v1625
        %v1659 = vunpack.c.l.b16 %v1626
        %v1660 = vunpack.c.l.b16 %v1627
        %v1661 = vunpack.c.l.b16 %v1628
        %v1662 = vunpack.c.l.b16 %v1629
        %v1663 = vunpack.c.l.b16 %v1630
        %v1664 = vunpack.c.l.b16 %v1631
        %v1665 = vunpack.c.l.b16 %v1632
        %v1666 = vunpack.c.l.b16 %v1633
        %v1667 = vunpack.c.l.b16 %v1634
        %v1668 = vunpack.c.l.b16 %v1635
        %v1669 = vunpack.c.l.b16 %v1636
        %v1670 = vunpack.c.l.b16 %v1637
        %v1671 = vunpack.c.l.b16 %v1638
        %v1672 = vpack.c.b16 %v1657, %v1656
        %v1673 = vpack.c.b16 %v1659, %v1658
        %v1674 = vpack.c.b16 %v1661, %v1660
        %v1675 = vpack.c.b16 %v1663, %v1662
        %v1676 = vpack.c.b16 %v1665, %v1664
        %v1677 = vpack.c.b16 %v1667, %v1666
        %v1678 = vpack.c.b16 %v1669, %v1668
        %v1679 = vpack.c.b16 %v1671, %v1670
        %1688 = vmatprep.subr.bf16.mxu0 0
        %1689 = vmatpush1.bf16.msra.mxu0 %v1672
        %1690 = vmatprep.subr.bf16.mxu0 0
        %1691 = vmatpush1.bf16.msra.mxu0 %v1673
        %1692 = vmatprep.subr.bf16.mxu0 0
        %1693 = vmatpush1.bf16.msra.mxu0 %v1674
        %1694 = vmatprep.subr.bf16.mxu0 0
        %1695 = vmatpush1.bf16.msra.mxu0 %v1675
        %1696 = vmatprep.subr.bf16.mxu0 0
        %1697 = vmatpush1.bf16.msra.mxu0 %v1676
        %1698 = vmatprep.subr.bf16.mxu0 0
        %1699 = vmatpush1.bf16.msra.mxu0 %v1677
        %1700 = vmatprep.subr.bf16.mxu0 0
        %1701 = vmatpush1.bf16.msra.mxu0 %v1678
        %1702 = vmatprep.subr.bf16.mxu0 0
        %1703 = vmatpush1.bf16.msra.mxu0 %v1679
        %1704 = vmatprep.subr.bf16.mxu0 0
        %1705 = vmatpush1.bf16.msra.mxu0 0
        %1706 = vmatprep.subr.bf16.mxu0 0
        %1707 = vmatpush1.bf16.msra.mxu0 0
        %1708 = vmatprep.subr.bf16.mxu0 0
        %1709 = vmatpush1.bf16.msra.mxu0 0
        %1710 = vmatprep.subr.bf16.mxu0 0
        %1711 = vmatpush1.bf16.msra.mxu0 0
        %1712 = vmatprep.subr.bf16.mxu0 0
        %1713 = vmatpush1.bf16.msra.mxu0 0
        %1714 = vmatprep.subr.bf16.mxu0 0
        %1715 = vmatpush1.bf16.msra.mxu0 0
        %1716 = vmatprep.subr.bf16.mxu0 0
        %1717 = vmatpush1.bf16.msra.mxu0 0
        %1718 = vmatprep.subr.bf16.mxu0 0
        %1719 = vmatpush1.bf16.msra.mxu0 0
        %1720 = vmatprep.mubr.bf16.mxu0 0
        %1721 = vmatmul.mubr.bf16.gmra.mrb[0].mxu0 %v1622
        %v1722 = vpop.f32.mrb[0].mxu0
        %v1723 = vadd.f32 %v1639, %v1722
        %v1724 = vpop.f32.mrb[0].mxu0
        %v1725 = vpop.f32.mrb[0].mxu0
        %v1726 = vpop.f32.mrb[0].mxu0
        %1727 = vdwg.mxu0
        %v1728 = vlaneseq
        %v1729 = vand.u32 %v1728, 127
        %vm1730 = vcmp.lt.s32.totalorder %v1729, 4
        %v1731 = vsel %vm1730, %v1723, -1e+30
        %vm1732 = vcmask 1040384
        %v1733 = vsel %vm1732, %v1731, -inf
        %1734 = vmax.xlane.f32.xlu0 %v1733
        %v1735 = vpop.xlane.xlu0 %1734
        %v1736 = vsub.f32 %v1731, %v1735
        %v1737 = vmul.f32 %v1736, 1.442695
        %v1738 = vpow.pop %v1737
        %v1739 = vsel %vm1732, %v1738, 0.0
        %1740 = vadd.xlane.f32.xlu0 %v1739
        %v1741 = vpop.xlane.xlu0 %1740
        %v1742 = vlog2.pop %v1741
        %v1743 = vmul.f32 %v1742, 0.6931472
        %v1744 = vsub.f32 %v1736, %v1743
        %1745 = vst [vmem:[%s544] sm:$0x1] %v1744
        %s1746 = sand.u32 %s319, 1
        %s1747 = scalar_lea.sflag [#allocation4], %s1746
        %s1748 = sand.u32 %s319, 1
        %s1749 = scalar_lea.vmem [#allocation14], %s1748
        // Predicated region
        $region101: #{tpu_custom_call.1} parent=71 // pred_check
          %p1750 = pneg %p329
        $region102: #{tpu_custom_call.1} parent=71 // pred_check_branch
          %1752 = sbr.rel (%p1750) target = $region104
        $region103: #{tpu_custom_call.1} parent=71 // pred_region
          %s1754 = ssub.s32 16, 16
          %1755 = vsyncadd %s1747, %s1754
          %s1756 = smul.addr %s33, 16
          %s1757 = scalar_lea.hbm %s13, %s1756
          %s1759 = sshll.u32 %s1749, 4
          %s1760 = int_to_ptr.vmem [resolvable:$true] %s1759
          %1762 = dma.vmem_to_hbm [thread:$0]  %s1760, 16, %s1757, %s1747
        $region104: #{tpu_custom_call.1} parent=71 // pred_fallthru
          _
      $region72: #{tpu_custom_call.1} parent=5 // pred_fallthru
        _
      %p1763 = scmp.le.s32.totalorder 2, %s28
      // Predicated region
      $region105: #{tpu_custom_call.1} parent=5 // pred_check
        %p1764 = pneg %p1763
      $region106: #{tpu_custom_call.1} parent=5 // pred_check_branch
        %1766 = sbr.rel (%p1764) target = $region108
      $region107: #{tpu_custom_call.1} parent=5 // pred_region
        %s1767 = ssub.s32 %s28, 2
        // Predicated region
        $region109: #{tpu_custom_call.1} parent=107 // pred_check
          %p1768 = pneg %p335
        $region110: #{tpu_custom_call.1} parent=107 // pred_check_branch
          %1770 = sbr.rel (%p1768) target = $region112
        $region111: #{tpu_custom_call.1} parent=107 // pred_region
          %s1771 = sand.u32 %s320, 1
          %s1772 = scalar_lea.sflag [#allocation4], %s1771
          %s1773 = sand.u32 %s320, 1
          %s1774 = scalar_lea.vmem [#allocation14], %s1773
          %1775 = dma.done %s1772, 16
        $region112: #{tpu_custom_call.1} parent=107 // pred_fallthru
          _
      $region108: #{tpu_custom_call.1} parent=5 // pred_fallthru
        _
    $region6: #{tpu_custom_call.1} parent=1 // loop_footer
      %s32 = sadd.s32 1, %s28
    $region7: #{tpu_custom_call.1} parent=1 // loop_footer_branch
      %27 = sbr.rel target = $region3
    $region8: #{tpu_custom_call.1} parent=1 // loop_exit
      _
    %1776 = vsyncpa [#allocation3], 1
    %s1777 = scalar_lea.sflag [#allocation3], 1
    %1778 = vsyncpa %s1777, 1
    %1779 = vsyncpa [#allocation6], 1
    %1780 = vsyncpa [#allocation9], 1
    %1781 = vsyncpa [#allocation12], 1
    %1782 = vsyncpa [#allocation4], 1
    %s1783 = scalar_lea.sflag [#allocation4], 1
    %1784 = vsyncpa %s1783, 1

</llo_original>
